<compile_context>
chip_gen: v7x
topology: tpu7x:2x2x1
jax: 0.10.0
libtpu: 0.0.40
codegen_flags: <defaults>
</compile_context>

<pallas_src>
import functools
import math

import jax
import jax.numpy as jnp
from jax.experimental import pallas as pl
from jax.experimental.pallas import tpu as pltpu


def _round_up(n, m):
    return ((n + m - 1) // m) * m


def _cdiv(a, b):
    return (a + b - 1) // b


def _device_kind():
    try:
        return jax.devices()[0].device_kind.lower()
    except Exception:
        return ""


def _is_v7x(kind):
    return ("v7" in kind) or ("7x" in kind)


# --------------------------------------------------------------------------- #
# Kernel
# --------------------------------------------------------------------------- #
def _vae_kernel(x_ref, eps_ref,
                we0_ref, be0_ref, we1_ref, be1_ref,
                wmulv_ref, bmulv_ref,
                wd0_ref, bd0_ref, wd1_ref, bd1_ref,
                xrec_ref, mulv_ref):
    f32 = jnp.float32

    # ----- encoder -----
    h = x_ref[...]
    h = jnp.maximum(
        jnp.dot(h, we0_ref[...], preferred_element_type=f32) + be0_ref[...], 0.0)
    h = jnp.maximum(
        jnp.dot(h, we1_ref[...], preferred_element_type=f32) + be1_ref[...], 0.0)

    # ----- fused mu/logvar projection (lane-dense packed output) -----
    # columns [0, lat_pad)         : mu     (first `latent` lanes meaningful)
    # columns [lat_pad, 2*lat_pad) : logvar (first `latent` lanes meaningful)
    mulv = jnp.dot(h, wmulv_ref[...], preferred_element_type=f32) + bmulv_ref[...]
    mulv_ref[...] = mulv

    lat_pad = mulv.shape[1] // 2          # static, 128-aligned
    mu_p = mulv[:, :lat_pad]
    lv_p = mulv[:, lat_pad:]

    # ----- reparameterize: z = mu + eps * exp(logvar / 2) -----
    # Padding lanes: mu_p/lv_p are exactly 0 there (zero wmulv/bmulv columns), so
    # z_pad = eps_pad * 1.  Those lanes then hit the zero rows of wd0 -> exact.
    z_p = mu_p + eps_ref[...] * jnp.exp(lv_p * 0.5)

    # ----- decoder (fc1 already folded into wd0/bd0 at prep time) -----
    d = jnp.maximum(
        jnp.dot(z_p, wd0_ref[...], preferred_element_type=f32) + bd0_ref[...], 0.0)
    xrec_ref[...] = jnp.dot(d, wd1_ref[...], preferred_element_type=f32) + bd1_ref[...]


# --------------------------------------------------------------------------- #
# Host-side parameter prep (one-time)
# --------------------------------------------------------------------------- #
def prepare_params(p):
    """One-time host-side fusion/padding of raw (already transposed) params."""
    latent = p["wmu"].shape[1]
    lat_pad = _round_up(latent, 128)
    h2 = p["wmu"].shape[0]
    hd = p["wd0"].shape[1]

    # Fused + lane-padded mu/logvar projection (padding columns are ZERO — this
    # is what makes the padded z lanes exact; see kernel comment).
    wmulv = jnp.zeros((h2, 2 * lat_pad), jnp.float32)
    wmulv = wmulv.at[:, :latent].set(p["wmu"])
    wmulv = wmulv.at[:, lat_pad:lat_pad + latent].set(p["wlv"])
    bmulv = jnp.zeros((1, 2 * lat_pad), jnp.float32)
    bmulv = bmulv.at[:, :latent].set(p["bmu"])
    bmulv = bmulv.at[:, lat_pad:lat_pad + latent].set(p["blv"])

    # Fold fc1 into the first decoder layer (no nonlinearity in between):
    #   theta @ Wd0 + bd0 = z @ (Wfc1 @ Wd0) + (bfc1 @ Wd0 + bd0)
    wd0_fold = p["wfc1"] @ p["wd0"]                 # (latent, hd)
    bd0_fold = p["bfc1"] @ p["wd0"] + p["bd0"]      # (1, hd)
    # Zero rows for the padded latent lanes (annihilates padded z lanes).
    wd0_pad = jnp.zeros((lat_pad, hd), jnp.float32).at[:latent, :].set(wd0_fold)

    return {
        "we0": p["we0"], "be0": p["be0"],
        "we1": p["we1"], "be1": p["be1"],
        "wmulv": wmulv, "bmulv": bmulv,
        "wd0": wd0_pad, "bd0": bd0_fold,
        "wd1": p["wd1"], "bd1": p["bd1"],
    }


# --------------------------------------------------------------------------- #
# Tiling choice
# --------------------------------------------------------------------------- #
def _choose_tiles(B, batch_tile, min_tiles):
    """Return (bt, bp, n_tiles): bt multiple of 8, bp = bt * n_tiles >= B."""
    batch_tile = max(8, batch_tile)
    bp8 = _round_up(B, 8)

    # Single-tile fast path (1-TC chips): whole batch in one grid step.
    if min_tiles <= 1 and bp8 <= batch_tile:
        return bp8, bp8, 1

    # Prefer a tile size that divides the sublane-rounded batch exactly (avoids
    # the jnp.pad HBM copy of x): largest multiple-of-8 divisor <= batch_tile
    # giving at least `min_tiles` tiles.
    best = None
    d = 8
    while d <= min(bp8, batch_tile):
        if bp8 % d == 0 and bp8 // d >= min_tiles:
            best = d
        d += 8
    if best is not None and best >= min(128, bp8):
        return best, bp8, bp8 // best

    # Fall back: pad the batch up to a multiple of the tile.
    bt = min(batch_tile, _round_up(_cdiv(bp8, max(min_tiles, 1)), 8))
    bp = _round_up(bp8, bt)
    return bt, bp, bp // bt


# --------------------------------------------------------------------------- #
# Wrapper
# --------------------------------------------------------------------------- #
def vae_forward_pallas(x, eps, fp, *, latent, batch_tile=1024, core_parallel=False):
    """Fused VAE forward.

    x:   (B, D_in)   float32
    eps: (B, latent) or (B, lat_pad) float32 -- extra lanes (if any) are ignored
         exactly (zero wmulv columns + zero wd0 rows).
    fp:  output of prepare_params(raw).
    """
    B, d_in = x.shape
    lat_pad = fp["wd0"].shape[0]
    d_out = fp["wd1"].shape[1]

    # ----- batch tiling (grid=(1,) on 1-TC chips when it fits; >=2 tiles when
    # sharding across v7x's two TensorCores) -----
    min_tiles = 2 if core_parallel else 1
    bt, bp, n_tiles = _choose_tiles(B, batch_tile, min_tiles)

    # ----- eps lane width: accept pre-padded eps, only pad if caller gave the
    # narrow (B, latent) version -----
    if eps.shape[1] == lat_pad:
        pass
    elif eps.shape[1] == latent:
        eps = jnp.pad(eps, ((0, 0), (0, lat_pad - latent)))
    else:
        raise ValueError(f"eps must have {latent} or {lat_pad} columns")

    # ----- batch padding only when unavoidable -----
    if bp != B:
        x = jnp.pad(x, ((0, bp - B), (0, 0)))
        eps = jnp.pad(eps, ((0, bp - B), (0, 0)))

    grid = (n_tiles,)

    def row_spec(feat):
        return pl.BlockSpec((bt, feat), lambda i: (i, 0))

    def const_spec(shape):
        # full weight/bias resident every grid step (constant block index)
        return pl.BlockSpec(shape, lambda i: (0, 0))

    order = ["we0", "be0", "we1", "be1", "wmulv", "bmulv",
             "wd0", "bd0", "wd1", "bd1"]
    p_args = [fp[k] for k in order]
    p_specs = [const_spec(fp[k].shape) for k in order]

    # ----- VMEM budget: weights once (constant index -> effectively resident),
    # activation tiles double-buffered, generous slack for intermediates.
    # Per-generation cap: v7x has 64 MiB VMEM (keep <=48), v5e/v6e have 128 MiB.
    param_bytes = sum(math.prod(fp[k].shape) * 4 for k in order)
    tile_bytes = bt * (d_in + lat_pad + d_out + 2 * lat_pad) * 4
    kind = _device_kind()
    cap = (48 << 20) if _is_v7x(kind) else (96 << 20)
    vmem_limit = int(min(max(param_bytes + 2 * tile_bytes + (8 << 20),
                             32 << 20), cap))

    if core_parallel:
        dim_sem = (pltpu.CORE_PARALLEL,)   # split the batch axis across TCs (v7x)
    else:
        dim_sem = ("parallel",)

    x_rec, mulv = pl.pallas_call(
        _vae_kernel,
        out_shape=(
            jax.ShapeDtypeStruct((bp, d_out), jnp.float32),          # x_reconst
            jax.ShapeDtypeStruct((bp, 2 * lat_pad), jnp.float32),    # packed mu|logvar
        ),
        grid_spec=pltpu.PrefetchScalarGridSpec(
            num_scalar_prefetch=0,
            grid=grid,
            in_specs=[row_spec(d_in), row_spec(lat_pad)] + p_specs,
            out_specs=[row_spec(d_out), row_spec(2 * lat_pad)],
        ),
        compiler_params=pltpu.CompilerParams(
            dimension_semantics=dim_sem,
            vmem_limit_bytes=vmem_limit),
    )(x, eps, *p_args)

    # TODO(synk): if downstream only needs mu/logvar for a KL term, consume the
    # packed `mulv` buffer directly instead of these two slice ops.
    mu = mulv[:B, :latent]
    logvar = mulv[:B, lat_pad:lat_pad + latent]
    return x_rec[:B], mu, logvar


# --------------------------------------------------------------------------- #
# Reference + init
# --------------------------------------------------------------------------- #
def init_linear(key, in_f, out_f):
    """Deterministic PyTorch-style init; weight stored already transposed to (in, out)."""
    kw, kb = jax.random.split(key)
    bound = 1.0 / jnp.sqrt(jnp.float32(in_f))
    w = jax.random.uniform(kw, (in_f, out_f), jnp.float32, -bound, bound)
    b = jax.random.uniform(kb, (1, out_f), jnp.float32, -bound, bound)
    return w, b


def reference_forward(x, eps, p):
    """Plain-JAX reference of the PyTorch forward (dropout p=0, collate_fn=None)."""
    h = jnp.maximum(x @ p["we0"] + p["be0"], 0.0)
    h = jnp.maximum(h @ p["we1"] + p["be1"], 0.0)
    mu = h @ p["wmu"] + p["bmu"]
    logvar = h @ p["wlv"] + p["blv"]
    z = mu + eps * jnp.exp(logvar / 2.0)
    theta = z @ p["wfc1"] + p["bfc1"]
    d = jnp.maximum(theta @ p["wd0"] + p["bd0"], 0.0)
    xrec = d @ p["wd1"] + p["bd1"]
    return xrec, mu, logvar


if __name__ == "__main__":
    # Small shapes consistent with the module's architecture:
    #   encode_dims = [256, 128, 128, 32], decode_dims = [32, 128, 256]
    encode_dims = [256, 128, 128, 32]
    decode_dims = [32, 128, 256]
    B = 256
    latent = encode_dims[-1]
    lat_pad = _round_up(latent, 128)

    key = jax.random.PRNGKey(0)
    keys = jax.random.split(key, 10)

    raw = {}
    raw["we0"], raw["be0"] = init_linear(keys[0], encode_dims[0], encode_dims[1])
    raw["we1"], raw["be1"] = init_linear(keys[1], encode_dims[1], encode_dims[2])
    raw["wmu"], raw["bmu"] = init_linear(keys[2], encode_dims[2], encode_dims[3])
    raw["wlv"], raw["blv"] = init_linear(keys[3], encode_dims[2], encode_dims[3])
    raw["wfc1"], raw["bfc1"] = init_linear(keys[4], encode_dims[3], encode_dims[3])
    raw["wd0"], raw["bd0"] = init_linear(keys[5], decode_dims[0], decode_dims[1])
    raw["wd1"], raw["bd1"] = init_linear(keys[6], decode_dims[1], decode_dims[2])

    x = jax.random.normal(keys[7], (B, encode_dims[0]), jnp.float32)
    # torch.randn_like(std) -> standard-normal noise.  Generated directly at the
    # padded lane width so the kernel wrapper never has to jnp.pad it; only the
    # first `latent` columns are semantically meaningful.
    eps_full = jax.random.normal(keys[8], (B, lat_pad), jnp.float32)

    fused = prepare_params(raw)                       # one-time host-side prep

    prefer_core_parallel = _is_v7x(_device_kind())    # 2 TensorCores per chip

    def run(core_parallel):
        fwd = jax.jit(functools.partial(
            vae_forward_pallas, latent=latent, batch_tile=1024,
            core_parallel=core_parallel))
        out = fwd(x, eps_full, fused)
        jax.block_until_ready(out)
        return out

    try:
        x_rec, mu, logvar = run(prefer_core_parallel)
    except Exception:
        if not prefer_core_parallel:
            raise
        # Fall back to plain semantics if CORE_PARALLEL is rejected on this chip.
        x_rec, mu, logvar = run(False)

    x_rec_ref, mu_ref, logvar_ref = reference_forward(x, eps_full[:, :latent], raw)
    assert jnp.allclose(mu, mu_ref, atol=1e-5, rtol=1e-5)
    assert jnp.allclose(logvar, logvar_ref, atol=1e-5, rtol=1e-5)
    assert jnp.allclose(x_rec, x_rec_ref, atol=1e-4, rtol=1e-4)

    print("KERNEL_OK")
</pallas_src>

<mosaic_0001>
module attributes {stable_mosaic.version = 11 : i64} {
  func.func @_vae_kernel(%arg0: i32, %arg1: memref<256x256xf32, #tpu.memory_space<vmem>>, %arg2: memref<256x128xf32, #tpu.memory_space<vmem>>, %arg3: memref<256x128xf32, #tpu.memory_space<vmem>>, %arg4: memref<1x128xf32, #tpu.memory_space<vmem>>, %arg5: memref<128x128xf32, #tpu.memory_space<vmem>>, %arg6: memref<1x128xf32, #tpu.memory_space<vmem>>, %arg7: memref<128x256xf32, #tpu.memory_space<vmem>>, %arg8: memref<1x256xf32, #tpu.memory_space<vmem>>, %arg9: memref<128x128xf32, #tpu.memory_space<vmem>>, %arg10: memref<1x128xf32, #tpu.memory_space<vmem>>, %arg11: memref<128x256xf32, #tpu.memory_space<vmem>>, %arg12: memref<1x256xf32, #tpu.memory_space<vmem>>, %arg13: memref<256x256xf32, #tpu.memory_space<vmem>>, %arg14: memref<256x256xf32, #tpu.memory_space<vmem>>) attributes {dimension_semantics = [#tpu.dimension_semantics<parallel>], iteration_bounds = array<i64: 1>, scalar_prefetch = 0 : i64, scratch_operands = 0 : i64, tpu.core_type = #tpu.core_type<tc>, window_params = [{transform_indices = @transform_0, window_bounds = array<i64: 256, 256>}, {transform_indices = @transform_1, window_bounds = array<i64: 256, 128>}, {pipeline_mode = #tpu.pipeline_mode<synchronous>, transform_indices = @transform_2, window_bounds = array<i64: 256, 128>}, {pipeline_mode = #tpu.pipeline_mode<synchronous>, transform_indices = @transform_3, window_bounds = array<i64: 1, 128>}, {pipeline_mode = #tpu.pipeline_mode<synchronous>, transform_indices = @transform_4, window_bounds = array<i64: 128, 128>}, {pipeline_mode = #tpu.pipeline_mode<synchronous>, transform_indices = @transform_5, window_bounds = array<i64: 1, 128>}, {pipeline_mode = #tpu.pipeline_mode<synchronous>, transform_indices = @transform_6, window_bounds = array<i64: 128, 256>}, {pipeline_mode = #tpu.pipeline_mode<synchronous>, transform_indices = @transform_7, window_bounds = array<i64: 1, 256>}, {pipeline_mode = #tpu.pipeline_mode<synchronous>, transform_indices = @transform_8, window_bounds = array<i64: 128, 128>}, {pipeline_mode = #tpu.pipeline_mode<synchronous>, transform_indices = @transform_9, window_bounds = array<i64: 1, 128>}, {pipeline_mode = #tpu.pipeline_mode<synchronous>, transform_indices = @transform_10, window_bounds = array<i64: 128, 256>}, {pipeline_mode = #tpu.pipeline_mode<synchronous>, transform_indices = @transform_11, window_bounds = array<i64: 1, 256>}, {transform_indices = @transform_12, window_bounds = array<i64: 256, 256>}, {transform_indices = @transform_13, window_bounds = array<i64: 256, 256>}]} {
    %c0 = arith.constant 0 : index
    %c0_0 = arith.constant 0 : index
    %0 = vector.load %arg1[%c0, %c0_0] : memref<256x256xf32, #tpu.memory_space<vmem>>, vector<256x256xf32>
    %c0_1 = arith.constant 0 : index
    %c0_2 = arith.constant 0 : index
    %1 = vector.load %arg3[%c0_1, %c0_2] : memref<256x128xf32, #tpu.memory_space<vmem>>, vector<256x128xf32>
    %cst = arith.constant dense<0.000000e+00> : vector<256x128xf32>
    %2 = tpu.matmul %0, %1, %cst {dimension_numbers = #tpu.dot_dimension_numbers<[1], [0], [0], [1], [0, 0, 1, 1], [], []>} : vector<256x256xf32>, vector<256x128xf32>, vector<256x128xf32> -> vector<256x128xf32>
    %c0_3 = arith.constant 0 : index
    %c0_4 = arith.constant 0 : index
    %3 = vector.load %arg4[%c0_3, %c0_4] : memref<1x128xf32, #tpu.memory_space<vmem>>, vector<1x128xf32>
    %4 = vector.broadcast %3 : vector<1x128xf32> to vector<256x128xf32>
    %5 = arith.addf %2, %4 : vector<256x128xf32>
    %cst_5 = arith.constant 0.000000e+00 : f32
    %6 = vector.broadcast %cst_5 : f32 to vector<256x128xf32>
    %7 = arith.maximumf %5, %6 : vector<256x128xf32>
    %c0_6 = arith.constant 0 : index
    %c0_7 = arith.constant 0 : index
    %8 = vector.load %arg5[%c0_6, %c0_7] : memref<128x128xf32, #tpu.memory_space<vmem>>, vector<128x128xf32>
    %cst_8 = arith.constant dense<0.000000e+00> : vector<256x128xf32>
    %9 = tpu.matmul %7, %8, %cst_8 {dimension_numbers = #tpu.dot_dimension_numbers<[1], [0], [0], [1], [0, 0, 1, 1], [], []>} : vector<256x128xf32>, vector<128x128xf32>, vector<256x128xf32> -> vector<256x128xf32>
    %c0_9 = arith.constant 0 : index
    %c0_10 = arith.constant 0 : index
    %10 = vector.load %arg6[%c0_9, %c0_10] : memref<1x128xf32, #tpu.memory_space<vmem>>, vector<1x128xf32>
    %11 = vector.broadcast %10 : vector<1x128xf32> to vector<256x128xf32>
    %12 = arith.addf %9, %11 : vector<256x128xf32>
    %cst_11 = arith.constant 0.000000e+00 : f32
    %13 = vector.broadcast %cst_11 : f32 to vector<256x128xf32>
    %14 = arith.maximumf %12, %13 : vector<256x128xf32>
    %c0_12 = arith.constant 0 : index
    %c0_13 = arith.constant 0 : index
    %15 = vector.load %arg7[%c0_12, %c0_13] : memref<128x256xf32, #tpu.memory_space<vmem>>, vector<128x256xf32>
    %cst_14 = arith.constant dense<0.000000e+00> : vector<256x256xf32>
    %16 = tpu.matmul %14, %15, %cst_14 {dimension_numbers = #tpu.dot_dimension_numbers<[1], [0], [0], [1], [0, 0, 1, 1], [], []>} : vector<256x128xf32>, vector<128x256xf32>, vector<256x256xf32> -> vector<256x256xf32>
    %c0_15 = arith.constant 0 : index
    %c0_16 = arith.constant 0 : index
    %17 = vector.load %arg8[%c0_15, %c0_16] : memref<1x256xf32, #tpu.memory_space<vmem>>, vector<1x256xf32>
    %18 = vector.broadcast %17 : vector<1x256xf32> to vector<256x256xf32>
    %19 = arith.addf %16, %18 : vector<256x256xf32>
    %c0_17 = arith.constant 0 : index
    %c0_18 = arith.constant 0 : index
    %20 = vector.load %arg14[%c0_17, %c0_18] : memref<256x256xf32, #tpu.memory_space<vmem>>, vector<256x256xf32>
    tpu.vector_store %arg14[%c0_17, %c0_18], %19 {strides = array<i32>} : memref<256x256xf32, #tpu.memory_space<vmem>>, vector<256x256xf32>,
    %21 = vector.extract_strided_slice %19 {offsets = [0, 0], sizes = [256, 128], strides = [1, 1]} : vector<256x256xf32> to vector<256x128xf32>
    %22 = vector.extract_strided_slice %19 {offsets = [0, 128], sizes = [256, 128], strides = [1, 1]} : vector<256x256xf32> to vector<256x128xf32>
    %c0_19 = arith.constant 0 : index
    %c0_20 = arith.constant 0 : index
    %23 = vector.load %arg2[%c0_19, %c0_20] : memref<256x128xf32, #tpu.memory_space<vmem>>, vector<256x128xf32>
    %cst_21 = arith.constant 5.000000e-01 : f32
    %24 = vector.broadcast %cst_21 : f32 to vector<256x128xf32>
    %25 = arith.mulf %22, %24 : vector<256x128xf32>
    %26 = math.exp %25 : vector<256x128xf32>
    %27 = arith.mulf %23, %26 : vector<256x128xf32>
    %28 = arith.addf %21, %27 : vector<256x128xf32>
    %c0_22 = arith.constant 0 : index
    %c0_23 = arith.constant 0 : index
    %29 = vector.load %arg9[%c0_22, %c0_23] : memref<128x128xf32, #tpu.memory_space<vmem>>, vector<128x128xf32>
    %cst_24 = arith.constant dense<0.000000e+00> : vector<256x128xf32>
    %30 = tpu.matmul %28, %29, %cst_24 {dimension_numbers = #tpu.dot_dimension_numbers<[1], [0], [0], [1], [0, 0, 1, 1], [], []>} : vector<256x128xf32>, vector<128x128xf32>, vector<256x128xf32> -> vector<256x128xf32>
    %c0_25 = arith.constant 0 : index
    %c0_26 = arith.constant 0 : index
    %31 = vector.load %arg10[%c0_25, %c0_26] : memref<1x128xf32, #tpu.memory_space<vmem>>, vector<1x128xf32>
    %32 = vector.broadcast %31 : vector<1x128xf32> to vector<256x128xf32>
    %33 = arith.addf %30, %32 : vector<256x128xf32>
    %cst_27 = arith.constant 0.000000e+00 : f32
    %34 = vector.broadcast %cst_27 : f32 to vector<256x128xf32>
    %35 = arith.maximumf %33, %34 : vector<256x128xf32>
    %c0_28 = arith.constant 0 : index
    %c0_29 = arith.constant 0 : index
    %36 = vector.load %arg11[%c0_28, %c0_29] : memref<128x256xf32, #tpu.memory_space<vmem>>, vector<128x256xf32>
    %cst_30 = arith.constant dense<0.000000e+00> : vector<256x256xf32>
    %37 = tpu.matmul %35, %36, %cst_30 {dimension_numbers = #tpu.dot_dimension_numbers<[1], [0], [0], [1], [0, 0, 1, 1], [], []>} : vector<256x128xf32>, vector<128x256xf32>, vector<256x256xf32> -> vector<256x256xf32>
    %c0_31 = arith.constant 0 : index
    %c0_32 = arith.constant 0 : index
    %38 = vector.load %arg12[%c0_31, %c0_32] : memref<1x256xf32, #tpu.memory_space<vmem>>, vector<1x256xf32>
    %39 = vector.broadcast %38 : vector<1x256xf32> to vector<256x256xf32>
    %40 = arith.addf %37, %39 : vector<256x256xf32>
    %c0_33 = arith.constant 0 : index
    %c0_34 = arith.constant 0 : index
    %41 = vector.load %arg13[%c0_33, %c0_34] : memref<256x256xf32, #tpu.memory_space<vmem>>, vector<256x256xf32>
    tpu.vector_store %arg13[%c0_33, %c0_34], %40 {strides = array<i32>} : memref<256x256xf32, #tpu.memory_space<vmem>>, vector<256x256xf32>,
    return
  }
  func.func @transform_0(%arg0: i32) -> (i32, i32) {
    %c0_i32 = arith.constant 0 : i32
    %c0_i32_0 = arith.constant 0 : i32
    return %arg0, %c0_i32 : i32, i32
  }
  func.func @transform_1(%arg0: i32) -> (i32, i32) {
    %c0_i32 = arith.constant 0 : i32
    %c0_i32_0 = arith.constant 0 : i32
    return %arg0, %c0_i32 : i32, i32
  }
  func.func @transform_2(%arg0: i32) -> (i32, i32) {
    %c0_i32 = arith.constant 0 : i32
    %c0_i32_0 = arith.constant 0 : i32
    %c0_i32_1 = arith.constant 0 : i32
    return %c0_i32, %c0_i32_0 : i32, i32
  }
  func.func @transform_3(%arg0: i32) -> (i32, i32) {
    %c0_i32 = arith.constant 0 : i32
    %c0_i32_0 = arith.constant 0 : i32
    %c0_i32_1 = arith.constant 0 : i32
    return %c0_i32, %c0_i32_0 : i32, i32
  }
  func.func @transform_4(%arg0: i32) -> (i32, i32) {
    %c0_i32 = arith.constant 0 : i32
    %c0_i32_0 = arith.constant 0 : i32
    %c0_i32_1 = arith.constant 0 : i32
    return %c0_i32, %c0_i32_0 : i32, i32
  }
  func.func @transform_5(%arg0: i32) -> (i32, i32) {
    %c0_i32 = arith.constant 0 : i32
    %c0_i32_0 = arith.constant 0 : i32
    %c0_i32_1 = arith.constant 0 : i32
    return %c0_i32, %c0_i32_0 : i32, i32
  }
  func.func @transform_6(%arg0: i32) -> (i32, i32) {
    %c0_i32 = arith.constant 0 : i32
    %c0_i32_0 = arith.constant 0 : i32
    %c0_i32_1 = arith.constant 0 : i32
    return %c0_i32, %c0_i32_0 : i32, i32
  }
  func.func @transform_7(%arg0: i32) -> (i32, i32) {
    %c0_i32 = arith.constant 0 : i32
    %c0_i32_0 = arith.constant 0 : i32
    %c0_i32_1 = arith.constant 0 : i32
    return %c0_i32, %c0_i32_0 : i32, i32
  }
  func.func @transform_8(%arg0: i32) -> (i32, i32) {
    %c0_i32 = arith.constant 0 : i32
    %c0_i32_0 = arith.constant 0 : i32
    %c0_i32_1 = arith.constant 0 : i32
    return %c0_i32, %c0_i32_0 : i32, i32
  }
  func.func @transform_9(%arg0: i32) -> (i32, i32) {
    %c0_i32 = arith.constant 0 : i32
    %c0_i32_0 = arith.constant 0 : i32
    %c0_i32_1 = arith.constant 0 : i32
    return %c0_i32, %c0_i32_0 : i32, i32
  }
  func.func @transform_10(%arg0: i32) -> (i32, i32) {
    %c0_i32 = arith.constant 0 : i32
    %c0_i32_0 = arith.constant 0 : i32
    %c0_i32_1 = arith.constant 0 : i32
    return %c0_i32, %c0_i32_0 : i32, i32
  }
  func.func @transform_11(%arg0: i32) -> (i32, i32) {
    %c0_i32 = arith.constant 0 : i32
    %c0_i32_0 = arith.constant 0 : i32
    %c0_i32_1 = arith.constant 0 : i32
    return %c0_i32, %c0_i32_0 : i32, i32
  }
  func.func @transform_12(%arg0: i32) -> (i32, i32) {
    %c0_i32 = arith.constant 0 : i32
    %c0_i32_0 = arith.constant 0 : i32
    return %arg0, %c0_i32 : i32, i32
  }
  func.func @transform_13(%arg0: i32) -> (i32, i32) {
    %c0_i32 = arith.constant 0 : i32
    %c0_i32_0 = arith.constant 0 : i32
    return %arg0, %c0_i32 : i32, i32
  }
}

</mosaic_0001>

<llo_original>
// kernel: vae_forward_pallas.1
$region0: #{vae_forward_pallas.1}
  #allocation0 [shape = 'u32[]', space=smem, size = 0x4, offset = 0x4, fixed_abs, tag = 'smem constant byte address 0x4 - core index']
  #allocation1 [shape = 'u32[144,128]{1,0:T(1,128)}', space=vmem, size = 0x12000, scoped, tag = 'internal scratch']
  %s0 = inlined_call_operand.hbm [shape: f32[256,256], index: 0, kind: input, shape index: {}]
  %s1 = inlined_call_operand.hbm [shape: f32[256,128], index: 1, kind: input, shape index: {}]
  %s2 = inlined_call_operand.hbm [shape: f32[256,128], index: 2, kind: input, shape index: {}]
  %s3 = inlined_call_operand.vmem [shape: f32[1,128], index: 3, kind: input, shape index: {}]
  %s4 = inlined_call_operand.hbm [shape: f32[128,128], index: 4, kind: input, shape index: {}]
  %s5 = inlined_call_operand.vmem [shape: f32[1,128], index: 5, kind: input, shape index: {}]
  %s6 = inlined_call_operand.hbm [shape: f32[128,256], index: 6, kind: input, shape index: {}]
  %s7 = inlined_call_operand.vmem [shape: f32[1,256], index: 7, kind: input, shape index: {}]
  %s8 = inlined_call_operand.hbm [shape: f32[128,128], index: 8, kind: input, shape index: {}]
  %s9 = inlined_call_operand.vmem [shape: f32[1,128], index: 9, kind: input, shape index: {}]
  %s10 = inlined_call_operand.hbm [shape: f32[128,256], index: 10, kind: input, shape index: {}]
  %s11 = inlined_call_operand.vmem [shape: f32[1,256], index: 11, kind: input, shape index: {}]
  %s12 = inlined_call_operand.hbm [shape: f32[256,256], index: 12, kind: output, shape index: {0}]
  %s13 = inlined_call_operand.vmem [shape: f32[256,256], index: 13, kind: output, shape index: {1}]
  %14 = xla_tuple %s12, %s13
  %s15 = sld [smem:[#allocation0]]
  $region94: #{vae_forward_pallas.1} parent=0
    _
  %s17 = ssub.s32 1, %s15
  %s18 = scalar_select 0, %s17, %s15
  $region1: #{vae_forward_pallas.1} parent=0
    #allocation2 [shape = 'u8[262144]{0}', space=vmem, size = 0x40000, scoped, tag = 'input window, operand 0, single buffered']
    #allocation3 [shape = 's32[1]{0}', space=sflag, size = 0x4, scoped, tag = 'scoped memory for vae_forward_pallas.1']
    #allocation4 [shape = 's32[1]{0}', space=sflag, size = 0x4, scoped, tag = 'scoped memory for vae_forward_pallas.1']
    #allocation5 [shape = 'u8[131072]{0}', space=vmem, size = 0x20000, scoped, tag = 'input window, operand 1, single buffered']
    #allocation6 [shape = 's32[1]{0}', space=sflag, size = 0x4, scoped, tag = 'scoped memory for vae_forward_pallas.1']
    #allocation7 [shape = 'u8[131072]{0}', space=vmem, size = 0x20000, scoped, tag = 'input window, operand 2, single buffered']
    #allocation8 [shape = 'u8[65536]{0}', space=vmem, size = 0x10000, scoped, tag = 'input window, operand 4, single buffered']
    #allocation9 [shape = 's32[1]{0}', space=sflag, size = 0x4, scoped, tag = 'scoped memory for vae_forward_pallas.1']
    #allocation10 [shape = 'u8[131072]{0}', space=vmem, size = 0x20000, scoped, tag = 'input window, operand 6, single buffered']
    #allocation11 [shape = 'u8[65536]{0}', space=vmem, size = 0x10000, scoped, tag = 'input window, operand 8, single buffered']
    #allocation12 [shape = 's32[1]{0}', space=sflag, size = 0x4, scoped, tag = 'scoped memory for vae_forward_pallas.1']
    #allocation13 [shape = 'u8[131072]{0}', space=vmem, size = 0x20000, scoped, tag = 'input window, operand 10, single buffered']
    #allocation14 [shape = 'u8[262144]{0}', space=vmem, size = 0x40000, scoped, tag = 'output window, operand 0, single buffered']
    %19 = vsyncpa [#allocation3], 0
    %20 = vsyncpa [#allocation6], 0
    %21 = vsyncpa [#allocation9], 0
    %22 = vsyncpa [#allocation12], 0
    %23 = vsyncpa [#allocation4], 0
    // Predicated region
    $region2: #{vae_forward_pallas.1} parent=1 // pred_check
      _
    $region3: #{vae_forward_pallas.1} parent=1 // pred_check_branch
      %25 = sbr.rel (0) target = $region5
    $region4: #{vae_forward_pallas.1} parent=1 // pred_region
      %s27 = ssub.s32 8192, 8192
      %28 = vsyncadd [#allocation3], %s27
      %s29 = sshll.u32 [#allocation2], 4
      %s30 = int_to_ptr.vmem [resolvable:$true] %s29
      %35 = dma.hbm_to_vmem [thread:$0]  %s0, 8192, %s30, [#allocation3], 256, 256, 16
    $region5: #{vae_forward_pallas.1} parent=1 // pred_fallthru
      _
    // Predicated region
    $region6: #{vae_forward_pallas.1} parent=1 // pred_check
      _
    $region7: #{vae_forward_pallas.1} parent=1 // pred_check_branch
      %37 = sbr.rel (0) target = $region9
    $region8: #{vae_forward_pallas.1} parent=1 // pred_region
      %s39 = ssub.s32 4096, 4096
      %40 = vsyncadd [#allocation6], %s39
      %s41 = sshll.u32 [#allocation5], 4
      %s42 = int_to_ptr.vmem [resolvable:$true] %s41
      %47 = dma.hbm_to_vmem [thread:$0]  %s1, 4096, %s42, [#allocation6], 128, 128, 8
    $region9: #{vae_forward_pallas.1} parent=1 // pred_fallthru
      _
    // Predicated region
    $region10: #{vae_forward_pallas.1} parent=1 // pred_check
      _
    $region11: #{vae_forward_pallas.1} parent=1 // pred_check_branch
      %49 = sbr.rel (0) target = $region13
    $region12: #{vae_forward_pallas.1} parent=1 // pred_region
      %s51 = ssub.s32 4096, 4096
      %52 = vsyncadd [#allocation6], %s51
      %s53 = sshll.u32 [#allocation7], 4
      %s54 = int_to_ptr.vmem [resolvable:$true] %s53
      %59 = dma.hbm_to_vmem [thread:$0]  %s2, 4096, %s54, [#allocation6], 128, 128, 8
    $region13: #{vae_forward_pallas.1} parent=1 // pred_fallthru
      _
    // Predicated region
    $region14: #{vae_forward_pallas.1} parent=1 // pred_check
      _
    $region15: #{vae_forward_pallas.1} parent=1 // pred_check_branch
      %61 = sbr.rel (0) target = $region17
    $region16: #{vae_forward_pallas.1} parent=1 // pred_region
      _
    $region17: #{vae_forward_pallas.1} parent=1 // pred_fallthru
      _
    // Predicated region
    $region18: #{vae_forward_pallas.1} parent=1 // pred_check
      _
    $region19: #{vae_forward_pallas.1} parent=1 // pred_check_branch
      %63 = sbr.rel (0) target = $region21
    $region20: #{vae_forward_pallas.1} parent=1 // pred_region
      %s65 = ssub.s32 2048, 2048
      %66 = vsyncadd [#allocation9], %s65
      %s67 = sshll.u32 [#allocation8], 4
      %s68 = int_to_ptr.vmem [resolvable:$true] %s67
      %73 = dma.hbm_to_vmem [thread:$0]  %s4, 2048, %s68, [#allocation9], 128, 128, 8
    $region21: #{vae_forward_pallas.1} parent=1 // pred_fallthru
      _
    // Predicated region
    $region22: #{vae_forward_pallas.1} parent=1 // pred_check
      _
    $region23: #{vae_forward_pallas.1} parent=1 // pred_check_branch
      %75 = sbr.rel (0) target = $region25
    $region24: #{vae_forward_pallas.1} parent=1 // pred_region
      _
    $region25: #{vae_forward_pallas.1} parent=1 // pred_fallthru
      _
    // Predicated region
    $region26: #{vae_forward_pallas.1} parent=1 // pred_check
      _
    $region27: #{vae_forward_pallas.1} parent=1 // pred_check_branch
      %77 = sbr.rel (0) target = $region29
    $region28: #{vae_forward_pallas.1} parent=1 // pred_region
      %s79 = ssub.s32 4096, 4096
      %80 = vsyncadd [#allocation9], %s79
      %s81 = sshll.u32 [#allocation10], 4
      %s82 = int_to_ptr.vmem [resolvable:$true] %s81
      %87 = dma.hbm_to_vmem [thread:$0]  %s6, 4096, %s82, [#allocation9], 256, 256, 16
    $region29: #{vae_forward_pallas.1} parent=1 // pred_fallthru
      _
    // Predicated region
    $region30: #{vae_forward_pallas.1} parent=1 // pred_check
      _
    $region31: #{vae_forward_pallas.1} parent=1 // pred_check_branch
      %89 = sbr.rel (0) target = $region33
    $region32: #{vae_forward_pallas.1} parent=1 // pred_region
      _
    $region33: #{vae_forward_pallas.1} parent=1 // pred_fallthru
      _
    // Predicated region
    $region34: #{vae_forward_pallas.1} parent=1 // pred_check
      _
    $region35: #{vae_forward_pallas.1} parent=1 // pred_check_branch
      %91 = sbr.rel (0) target = $region37
    $region36: #{vae_forward_pallas.1} parent=1 // pred_region
      %s93 = ssub.s32 2048, 2048
      %94 = vsyncadd [#allocation12], %s93
      %s95 = sshll.u32 [#allocation11], 4
      %s96 = int_to_ptr.vmem [resolvable:$true] %s95
      %101 = dma.hbm_to_vmem [thread:$0]  %s8, 2048, %s96, [#allocation12], 128, 128, 8
    $region37: #{vae_forward_pallas.1} parent=1 // pred_fallthru
      _
    // Predicated region
    $region38: #{vae_forward_pallas.1} parent=1 // pred_check
      _
    $region39: #{vae_forward_pallas.1} parent=1 // pred_check_branch
      %103 = sbr.rel (0) target = $region41
    $region40: #{vae_forward_pallas.1} parent=1 // pred_region
      _
    $region41: #{vae_forward_pallas.1} parent=1 // pred_fallthru
      _
    // Predicated region
    $region42: #{vae_forward_pallas.1} parent=1 // pred_check
      _
    $region43: #{vae_forward_pallas.1} parent=1 // pred_check_branch
      %105 = sbr.rel (0) target = $region45
    $region44: #{vae_forward_pallas.1} parent=1 // pred_region
      %s107 = ssub.s32 4096, 4096
      %108 = vsyncadd [#allocation12], %s107
      %s109 = sshll.u32 [#allocation13], 4
      %s110 = int_to_ptr.vmem [resolvable:$true] %s109
      %115 = dma.hbm_to_vmem [thread:$0]  %s10, 4096, %s110, [#allocation12], 256, 256, 16
    $region45: #{vae_forward_pallas.1} parent=1 // pred_fallthru
      _
    // Predicated region
    $region46: #{vae_forward_pallas.1} parent=1 // pred_check
      _
    $region47: #{vae_forward_pallas.1} parent=1 // pred_check_branch
      %117 = sbr.rel (0) target = $region49
    $region48: #{vae_forward_pallas.1} parent=1 // pred_region
      _
    $region49: #{vae_forward_pallas.1} parent=1 // pred_fallthru
      _
    // Predicated region
    $region50: #{vae_forward_pallas.1} parent=1 // pred_check
      _
    $region51: #{vae_forward_pallas.1} parent=1 // pred_check_branch
      %119 = sbr.rel (0) target = $region53
    $region52: #{vae_forward_pallas.1} parent=1 // pred_region
      %120 = dma.done [#allocation3], 8192
    $region53: #{vae_forward_pallas.1} parent=1 // pred_fallthru
      _
    // Predicated region
    $region54: #{vae_forward_pallas.1} parent=1 // pred_check
      _
    $region55: #{vae_forward_pallas.1} parent=1 // pred_check_branch
      %122 = sbr.rel (0) target = $region57
    $region56: #{vae_forward_pallas.1} parent=1 // pred_region
      %123 = dma.done [#allocation6], 4096
    $region57: #{vae_forward_pallas.1} parent=1 // pred_fallthru
      _
    // Predicated region
    $region58: #{vae_forward_pallas.1} parent=1 // pred_check
      _
    $region59: #{vae_forward_pallas.1} parent=1 // pred_check_branch
      %125 = sbr.rel (0) target = $region61
    $region60: #{vae_forward_pallas.1} parent=1 // pred_region
      %126 = dma.done [#allocation6], 4096
    $region61: #{vae_forward_pallas.1} parent=1 // pred_fallthru
      _
    // Predicated region
    $region62: #{vae_forward_pallas.1} parent=1 // pred_check
      _
    $region63: #{vae_forward_pallas.1} parent=1 // pred_check_branch
      %128 = sbr.rel (0) target = $region65
    $region64: #{vae_forward_pallas.1} parent=1 // pred_region
      %129 = dma.done [#allocation9], 2048
    $region65: #{vae_forward_pallas.1} parent=1 // pred_fallthru
      _
    // Predicated region
    $region66: #{vae_forward_pallas.1} parent=1 // pred_check
      _
    $region67: #{vae_forward_pallas.1} parent=1 // pred_check_branch
      %131 = sbr.rel (0) target = $region69
    $region68: #{vae_forward_pallas.1} parent=1 // pred_region
      %132 = dma.done [#allocation9], 4096
    $region69: #{vae_forward_pallas.1} parent=1 // pred_fallthru
      _
    // Predicated region
    $region70: #{vae_forward_pallas.1} parent=1 // pred_check
      _
    $region71: #{vae_forward_pallas.1} parent=1 // pred_check_branch
      %134 = sbr.rel (0) target = $region73
    $region72: #{vae_forward_pallas.1} parent=1 // pred_region
      %135 = dma.done [#allocation12], 2048
    $region73: #{vae_forward_pallas.1} parent=1 // pred_fallthru
      _
    // Predicated region
    $region74: #{vae_forward_pallas.1} parent=1 // pred_check
      _
    $region75: #{vae_forward_pallas.1} parent=1 // pred_check_branch
      %137 = sbr.rel (0) target = $region77
    $region76: #{vae_forward_pallas.1} parent=1 // pred_region
      %138 = dma.done [#allocation12], 4096
    $region77: #{vae_forward_pallas.1} parent=1 // pred_fallthru
      _
    %v139 = vld [vmem:[#allocation2] sm:$0xff]
    %v140 = vld [vmem:[#allocation2 + $0x8] sm:$0xff]
    %v141 = vld [vmem:[#allocation2 + $0x10] sm:$0xff]
    %v142 = vld [vmem:[#allocation2 + $0x18] sm:$0xff]
    %v143 = vld [vmem:[#allocation2 + $0x20] sm:$0xff]
    %v144 = vld [vmem:[#allocation2 + $0x28] sm:$0xff]
    %v145 = vld [vmem:[#allocation2 + $0x30] sm:$0xff]
    %v146 = vld [vmem:[#allocation2 + $0x38] sm:$0xff]
    %v147 = vld [vmem:[#allocation2 + $0x40] sm:$0xff]
    %v148 = vld [vmem:[#allocation2 + $0x48] sm:$0xff]
    %v149 = vld [vmem:[#allocation2 + $0x50] sm:$0xff]
    %v150 = vld [vmem:[#allocation2 + $0x58] sm:$0xff]
    %v151 = vld [vmem:[#allocation2 + $0x60] sm:$0xff]
    %v152 = vld [vmem:[#allocation2 + $0x68] sm:$0xff]
    %v153 = vld [vmem:[#allocation2 + $0x70] sm:$0xff]
    %v154 = vld [vmem:[#allocation2 + $0x78] sm:$0xff]
    %v155 = vld [vmem:[#allocation2 + $0x80] sm:$0xff]
    %v156 = vld [vmem:[#allocation2 + $0x88] sm:$0xff]
    %v157 = vld [vmem:[#allocation2 + $0x90] sm:$0xff]
    %v158 = vld [vmem:[#allocation2 + $0x98] sm:$0xff]
    %v159 = vld [vmem:[#allocation2 + $0xa0] sm:$0xff]
    %v160 = vld [vmem:[#allocation2 + $0xa8] sm:$0xff]
    %v161 = vld [vmem:[#allocation2 + $0xb0] sm:$0xff]
    %v162 = vld [vmem:[#allocation2 + $0xb8] sm:$0xff]
    %v163 = vld [vmem:[#allocation2 + $0xc0] sm:$0xff]
    %v164 = vld [vmem:[#allocation2 + $0xc8] sm:$0xff]
    %v165 = vld [vmem:[#allocation2 + $0xd0] sm:$0xff]
    %v166 = vld [vmem:[#allocation2 + $0xd8] sm:$0xff]
    %v167 = vld [vmem:[#allocation2 + $0xe0] sm:$0xff]
    %v168 = vld [vmem:[#allocation2 + $0xe8] sm:$0xff]
    %v169 = vld [vmem:[#allocation2 + $0xf0] sm:$0xff]
    %v170 = vld [vmem:[#allocation2 + $0xf8] sm:$0xff]
    %v171 = vld [vmem:[#allocation2 + $0x100] sm:$0xff]
    %v172 = vld [vmem:[#allocation2 + $0x108] sm:$0xff]
    %v173 = vld [vmem:[#allocation2 + $0x110] sm:$0xff]
    %v174 = vld [vmem:[#allocation2 + $0x118] sm:$0xff]
    %v175 = vld [vmem:[#allocation2 + $0x120] sm:$0xff]
    %v176 = vld [vmem:[#allocation2 + $0x128] sm:$0xff]
    %v177 = vld [vmem:[#allocation2 + $0x130] sm:$0xff]
    %v178 = vld [vmem:[#allocation2 + $0x138] sm:$0xff]
    %v179 = vld [vmem:[#allocation2 + $0x140] sm:$0xff]
    %v180 = vld [vmem:[#allocation2 + $0x148] sm:$0xff]
    %v181 = vld [vmem:[#allocation2 + $0x150] sm:$0xff]
    %v182 = vld [vmem:[#allocation2 + $0x158] sm:$0xff]
    %v183 = vld [vmem:[#allocation2 + $0x160] sm:$0xff]
    %v184 = vld [vmem:[#allocation2 + $0x168] sm:$0xff]
    %v185 = vld [vmem:[#allocation2 + $0x170] sm:$0xff]
    %v186 = vld [vmem:[#allocation2 + $0x178] sm:$0xff]
    %v187 = vld [vmem:[#allocation2 + $0x180] sm:$0xff]
    %v188 = vld [vmem:[#allocation2 + $0x188] sm:$0xff]
    %v189 = vld [vmem:[#allocation2 + $0x190] sm:$0xff]
    %v190 = vld [vmem:[#allocation2 + $0x198] sm:$0xff]
    %v191 = vld [vmem:[#allocation2 + $0x1a0] sm:$0xff]
    %v192 = vld [vmem:[#allocation2 + $0x1a8] sm:$0xff]
    %v193 = vld [vmem:[#allocation2 + $0x1b0] sm:$0xff]
    %v194 = vld [vmem:[#allocation2 + $0x1b8] sm:$0xff]
    %v195 = vld [vmem:[#allocation2 + $0x1c0] sm:$0xff]
    %v196 = vld [vmem:[#allocation2 + $0x1c8] sm:$0xff]
    %v197 = vld [vmem:[#allocation2 + $0x1d0] sm:$0xff]
    %v198 = vld [vmem:[#allocation2 + $0x1d8] sm:$0xff]
    %v199 = vld [vmem:[#allocation2 + $0x1e0] sm:$0xff]
    %v200 = vld [vmem:[#allocation2 + $0x1e8] sm:$0xff]
    %v201 = vld [vmem:[#allocation2 + $0x1f0] sm:$0xff]
    %v202 = vld [vmem:[#allocation2 + $0x1f8] sm:$0xff]
    %v203 = vld [vmem:[#allocation7] sm:$0xff]
    %v204 = vld [vmem:[#allocation7 + $0x8] sm:$0xff]
    %v205 = vld [vmem:[#allocation7 + $0x10] sm:$0xff]
    %v206 = vld [vmem:[#allocation7 + $0x18] sm:$0xff]
    %v207 = vld [vmem:[#allocation7 + $0x20] sm:$0xff]
    %v208 = vld [vmem:[#allocation7 + $0x28] sm:$0xff]
    %v209 = vld [vmem:[#allocation7 + $0x30] sm:$0xff]
    %v210 = vld [vmem:[#allocation7 + $0x38] sm:$0xff]
    %v211 = vld [vmem:[#allocation7 + $0x40] sm:$0xff]
    %v212 = vld [vmem:[#allocation7 + $0x48] sm:$0xff]
    %v213 = vld [vmem:[#allocation7 + $0x50] sm:$0xff]
    %v214 = vld [vmem:[#allocation7 + $0x58] sm:$0xff]
    %v215 = vld [vmem:[#allocation7 + $0x60] sm:$0xff]
    %v216 = vld [vmem:[#allocation7 + $0x68] sm:$0xff]
    %v217 = vld [vmem:[#allocation7 + $0x70] sm:$0xff]
    %v218 = vld [vmem:[#allocation7 + $0x78] sm:$0xff]
    %v219 = vld [vmem:[#allocation7 + $0x80] sm:$0xff]
    %v220 = vld [vmem:[#allocation7 + $0x88] sm:$0xff]
    %v221 = vld [vmem:[#allocation7 + $0x90] sm:$0xff]
    %v222 = vld [vmem:[#allocation7 + $0x98] sm:$0xff]
    %v223 = vld [vmem:[#allocation7 + $0xa0] sm:$0xff]
    %v224 = vld [vmem:[#allocation7 + $0xa8] sm:$0xff]
    %v225 = vld [vmem:[#allocation7 + $0xb0] sm:$0xff]
    %v226 = vld [vmem:[#allocation7 + $0xb8] sm:$0xff]
    %v227 = vld [vmem:[#allocation7 + $0xc0] sm:$0xff]
    %v228 = vld [vmem:[#allocation7 + $0xc8] sm:$0xff]
    %v229 = vld [vmem:[#allocation7 + $0xd0] sm:$0xff]
    %v230 = vld [vmem:[#allocation7 + $0xd8] sm:$0xff]
    %v231 = vld [vmem:[#allocation7 + $0xe0] sm:$0xff]
    %v232 = vld [vmem:[#allocation7 + $0xe8] sm:$0xff]
    %v233 = vld [vmem:[#allocation7 + $0xf0] sm:$0xff]
    %v234 = vld [vmem:[#allocation7 + $0xf8] sm:$0xff]
    %v235 = vld [vmem:[%s3] sm:$0x1]
    %v237 = vlaneseq
    %v238 = vshrl.u32 %v237, 7
    %v239 = vsub.s32 0, %v238
    %v240 = vrot.slane %v235, %v239
    %242 = vmatprep.subr.mxu0 0.0
    %243 = vmatpush1.msra.mxu0 %v203
    %244 = vmatprep.subr.mxu0 0.0
    %245 = vmatpush1.msra.mxu0 %v204
    %246 = vmatprep.subr.mxu0 0.0
    %247 = vmatpush1.msra.mxu0 %v205
    %248 = vmatprep.subr.mxu0 0.0
    %249 = vmatpush1.msra.mxu0 %v206
    %250 = vmatprep.subr.mxu0 0.0
    %251 = vmatpush1.msra.mxu0 %v207
    %252 = vmatprep.subr.mxu0 0.0
    %253 = vmatpush1.msra.mxu0 %v208
    %254 = vmatprep.subr.mxu0 0.0
    %255 = vmatpush1.msra.mxu0 %v209
    %256 = vmatprep.subr.mxu0 0.0
    %257 = vmatpush1.msra.mxu0 %v210
    %258 = vmatprep.subr.mxu0 0.0
    %259 = vmatpush1.msra.mxu0 %v211
    %260 = vmatprep.subr.mxu0 0.0
    %261 = vmatpush1.msra.mxu0 %v212
    %262 = vmatprep.subr.mxu0 0.0
    %263 = vmatpush1.msra.mxu0 %v213
    %264 = vmatprep.subr.mxu0 0.0
    %265 = vmatpush1.msra.mxu0 %v214
    %266 = vmatprep.subr.mxu0 0.0
    %267 = vmatpush1.msra.mxu0 %v215
    %268 = vmatprep.subr.mxu0 0.0
    %269 = vmatpush1.msra.mxu0 %v216
    %270 = vmatprep.subr.mxu0 0.0
    %271 = vmatpush1.msra.mxu0 %v217
    %272 = vmatprep.subr.mxu0 0.0
    %273 = vmatpush1.msra.mxu0 %v218
    %274 = vmatprep.subr.mxu0 0.0
    %275 = vmatpush1.msra.mxu0 %v219
    %276 = vmatprep.subr.mxu0 0.0
    %277 = vmatpush1.msra.mxu0 %v220
    %278 = vmatprep.subr.mxu0 0.0
    %279 = vmatpush1.msra.mxu0 %v221
    %280 = vmatprep.subr.mxu0 0.0
    %281 = vmatpush1.msra.mxu0 %v222
    %282 = vmatprep.subr.mxu0 0.0
    %283 = vmatpush1.msra.mxu0 %v223
    %284 = vmatprep.subr.mxu0 0.0
    %285 = vmatpush1.msra.mxu0 %v224
    %286 = vmatprep.subr.mxu0 0.0
    %287 = vmatpush1.msra.mxu0 %v225
    %288 = vmatprep.subr.mxu0 0.0
    %289 = vmatpush1.msra.mxu0 %v226
    %290 = vmatprep.subr.mxu0 0.0
    %291 = vmatpush1.msra.mxu0 %v227
    %292 = vmatprep.subr.mxu0 0.0
    %293 = vmatpush1.msra.mxu0 %v228
    %294 = vmatprep.subr.mxu0 0.0
    %295 = vmatpush1.msra.mxu0 %v229
    %296 = vmatprep.subr.mxu0 0.0
    %297 = vmatpush1.msra.mxu0 %v230
    %298 = vmatprep.subr.mxu0 0.0
    %299 = vmatpush1.msra.mxu0 %v231
    %300 = vmatprep.subr.mxu0 0.0
    %301 = vmatpush1.msra.mxu0 %v232
    %302 = vmatprep.subr.mxu0 0.0
    %303 = vmatpush1.msra.mxu0 %v233
    %304 = vmatprep.subr.mxu0 0.0
    %305 = vmatpush1.msra.mxu0 %v234
    %306 = vmatprep.mubr.f32.mxu0 %v140
    %307 = vmatmul.mubr.f32.gmra.mrb[0].mxu0 %v139
    %v308 = vpop.f32.mrb[0].mxu0
    %v309 = vadd.f32 %v240, %v308
    %v310 = vpop.f32.mrb[0].mxu0
    %311 = vmatprep.mubr.f32.mxu0 %v142
    %312 = vmatmul.mubr.f32.gmra.mrb[0].mxu0 %v141
    %v313 = vpop.f32.mrb[0].mxu0
    %v314 = vadd.f32 %v240, %v313
    %v315 = vpop.f32.mrb[0].mxu0
    %316 = vmatprep.mubr.f32.mxu0 %v144
    %317 = vmatmul.mubr.f32.gmra.mrb[0].mxu0 %v143
    %v318 = vpop.f32.mrb[0].mxu0
    %v319 = vadd.f32 %v240, %v318
    %v320 = vpop.f32.mrb[0].mxu0
    %321 = vmatprep.mubr.f32.mxu0 %v146
    %322 = vmatmul.mubr.f32.gmra.mrb[0].mxu0 %v145
    %v323 = vpop.f32.mrb[0].mxu0
    %v324 = vadd.f32 %v240, %v323
    %v325 = vpop.f32.mrb[0].mxu0
    %326 = vmatprep.mubr.f32.mxu0 %v148
    %327 = vmatmul.mubr.f32.gmra.mrb[0].mxu0 %v147
    %v328 = vpop.f32.mrb[0].mxu0
    %v329 = vadd.f32 %v240, %v328
    %v330 = vpop.f32.mrb[0].mxu0
    %331 = vmatprep.mubr.f32.mxu0 %v150
    %332 = vmatmul.mubr.f32.gmra.mrb[0].mxu0 %v149
    %v333 = vpop.f32.mrb[0].mxu0
    %v334 = vadd.f32 %v240, %v333
    %v335 = vpop.f32.mrb[0].mxu0
    %336 = vmatprep.mubr.f32.mxu0 %v152
    %337 = vmatmul.mubr.f32.gmra.mrb[0].mxu0 %v151
    %v338 = vpop.f32.mrb[0].mxu0
    %v339 = vadd.f32 %v240, %v338
    %v340 = vpop.f32.mrb[0].mxu0
    %341 = vmatprep.mubr.f32.mxu0 %v154
    %342 = vmatmul.mubr.f32.gmra.mrb[0].mxu0 %v153
    %v343 = vpop.f32.mrb[0].mxu0
    %v344 = vadd.f32 %v240, %v343
    %v345 = vpop.f32.mrb[0].mxu0
    %346 = vmatprep.mubr.f32.mxu0 %v156
    %347 = vmatmul.mubr.f32.gmra.mrb[0].mxu0 %v155
    %v348 = vpop.f32.mrb[0].mxu0
    %v349 = vadd.f32 %v240, %v348
    %v350 = vpop.f32.mrb[0].mxu0
    %351 = vmatprep.mubr.f32.mxu0 %v158
    %352 = vmatmul.mubr.f32.gmra.mrb[0].mxu0 %v157
    %v353 = vpop.f32.mrb[0].mxu0
    %v354 = vadd.f32 %v240, %v353
    %v355 = vpop.f32.mrb[0].mxu0
    %356 = vmatprep.mubr.f32.mxu0 %v160
    %357 = vmatmul.mubr.f32.gmra.mrb[0].mxu0 %v159
    %v358 = vpop.f32.mrb[0].mxu0
    %v359 = vadd.f32 %v240, %v358
    %v360 = vpop.f32.mrb[0].mxu0
    %361 = vmatprep.mubr.f32.mxu0 %v162
    %362 = vmatmul.mubr.f32.gmra.mrb[0].mxu0 %v161
    %v363 = vpop.f32.mrb[0].mxu0
    %v364 = vadd.f32 %v240, %v363
    %v365 = vpop.f32.mrb[0].mxu0
    %366 = vmatprep.mubr.f32.mxu0 %v164
    %367 = vmatmul.mubr.f32.gmra.mrb[0].mxu0 %v163
    %v368 = vpop.f32.mrb[0].mxu0
    %v369 = vadd.f32 %v240, %v368
    %v370 = vpop.f32.mrb[0].mxu0
    %371 = vmatprep.mubr.f32.mxu0 %v166
    %372 = vmatmul.mubr.f32.gmra.mrb[0].mxu0 %v165
    %v373 = vpop.f32.mrb[0].mxu0
    %v374 = vadd.f32 %v240, %v373
    %v375 = vpop.f32.mrb[0].mxu0
    %376 = vmatprep.mubr.f32.mxu0 %v168
    %377 = vmatmul.mubr.f32.gmra.mrb[0].mxu0 %v167
    %v378 = vpop.f32.mrb[0].mxu0
    %v379 = vadd.f32 %v240, %v378
    %v380 = vpop.f32.mrb[0].mxu0
    %381 = vmatprep.mubr.f32.mxu0 %v170
    %382 = vmatmul.mubr.f32.gmra.mrb[0].mxu0 %v169
    %v383 = vpop.f32.mrb[0].mxu0
    %v384 = vadd.f32 %v240, %v383
    %v385 = vpop.f32.mrb[0].mxu0
    %386 = vmatprep.mubr.f32.mxu0 %v172
    %387 = vmatmul.mubr.f32.gmra.mrb[0].mxu0 %v171
    %v388 = vpop.f32.mrb[0].mxu0
    %v389 = vadd.f32 %v240, %v388
    %v390 = vpop.f32.mrb[0].mxu0
    %391 = vmatprep.mubr.f32.mxu0 %v174
    %392 = vmatmul.mubr.f32.gmra.mrb[0].mxu0 %v173
    %v393 = vpop.f32.mrb[0].mxu0
    %v394 = vadd.f32 %v240, %v393
    %v395 = vpop.f32.mrb[0].mxu0
    %396 = vmatprep.mubr.f32.mxu0 %v176
    %397 = vmatmul.mubr.f32.gmra.mrb[0].mxu0 %v175
    %v398 = vpop.f32.mrb[0].mxu0
    %v399 = vadd.f32 %v240, %v398
    %v400 = vpop.f32.mrb[0].mxu0
    %401 = vmatprep.mubr.f32.mxu0 %v178
    %402 = vmatmul.mubr.f32.gmra.mrb[0].mxu0 %v177
    %v403 = vpop.f32.mrb[0].mxu0
    %v404 = vadd.f32 %v240, %v403
    %v405 = vpop.f32.mrb[0].mxu0
    %406 = vmatprep.mubr.f32.mxu0 %v180
    %407 = vmatmul.mubr.f32.gmra.mrb[0].mxu0 %v179
    %v408 = vpop.f32.mrb[0].mxu0
    %v409 = vadd.f32 %v240, %v408
    %v410 = vpop.f32.mrb[0].mxu0
    %411 = vmatprep.mubr.f32.mxu0 %v182
    %412 = vmatmul.mubr.f32.gmra.mrb[0].mxu0 %v181
    %v413 = vpop.f32.mrb[0].mxu0
    %v414 = vadd.f32 %v240, %v413
    %v415 = vpop.f32.mrb[0].mxu0
    %416 = vmatprep.mubr.f32.mxu0 %v184
    %417 = vmatmul.mubr.f32.gmra.mrb[0].mxu0 %v183
    %v418 = vpop.f32.mrb[0].mxu0
    %v419 = vadd.f32 %v240, %v418
    %v420 = vpop.f32.mrb[0].mxu0
    %421 = vmatprep.mubr.f32.mxu0 %v186
    %422 = vmatmul.mubr.f32.gmra.mrb[0].mxu0 %v185
    %v423 = vpop.f32.mrb[0].mxu0
    %v424 = vadd.f32 %v240, %v423
    %v425 = vpop.f32.mrb[0].mxu0
    %426 = vmatprep.mubr.f32.mxu0 %v188
    %427 = vmatmul.mubr.f32.gmra.mrb[0].mxu0 %v187
    %v428 = vpop.f32.mrb[0].mxu0
    %v429 = vadd.f32 %v240, %v428
    %v430 = vpop.f32.mrb[0].mxu0
    %431 = vmatprep.mubr.f32.mxu0 %v190
    %432 = vmatmul.mubr.f32.gmra.mrb[0].mxu0 %v189
    %v433 = vpop.f32.mrb[0].mxu0
    %v434 = vadd.f32 %v240, %v433
    %v435 = vpop.f32.mrb[0].mxu0
    %436 = vmatprep.mubr.f32.mxu0 %v192
    %437 = vmatmul.mubr.f32.gmra.mrb[0].mxu0 %v191
    %v438 = vpop.f32.mrb[0].mxu0
    %v439 = vadd.f32 %v240, %v438
    %v440 = vpop.f32.mrb[0].mxu0
    %441 = vmatprep.mubr.f32.mxu0 %v194
    %442 = vmatmul.mubr.f32.gmra.mrb[0].mxu0 %v193
    %v443 = vpop.f32.mrb[0].mxu0
    %v444 = vadd.f32 %v240, %v443
    %v445 = vpop.f32.mrb[0].mxu0
    %446 = vmatprep.mubr.f32.mxu0 %v196
    %447 = vmatmul.mubr.f32.gmra.mrb[0].mxu0 %v195
    %v448 = vpop.f32.mrb[0].mxu0
    %v449 = vadd.f32 %v240, %v448
    %v450 = vpop.f32.mrb[0].mxu0
    %451 = vmatprep.mubr.f32.mxu0 %v198
    %452 = vmatmul.mubr.f32.gmra.mrb[0].mxu0 %v197
    %v453 = vpop.f32.mrb[0].mxu0
    %v454 = vadd.f32 %v240, %v453
    %v455 = vpop.f32.mrb[0].mxu0
    %456 = vmatprep.mubr.f32.mxu0 %v200
    %457 = vmatmul.mubr.f32.gmra.mrb[0].mxu0 %v199
    %v458 = vpop.f32.mrb[0].mxu0
    %v459 = vadd.f32 %v240, %v458
    %v460 = vpop.f32.mrb[0].mxu0
    %461 = vmatprep.mubr.f32.mxu0 %v202
    %462 = vmatmul.mubr.f32.gmra.mrb[0].mxu0 %v201
    %v463 = vpop.f32.mrb[0].mxu0
    %v464 = vadd.f32 %v240, %v463
    %v465 = vpop.f32.mrb[0].mxu0
    %466 = vdwg.mxu0
    %v467 = vmax.f32 %v309, 0.0
    %v468 = vmax.f32 %v314, 0.0
    %v469 = vmax.f32 %v319, 0.0
    %v470 = vmax.f32 %v324, 0.0
    %v471 = vmax.f32 %v329, 0.0
    %v472 = vmax.f32 %v334, 0.0
    %v473 = vmax.f32 %v339, 0.0
    %v474 = vmax.f32 %v344, 0.0
    %v475 = vmax.f32 %v349, 0.0
    %v476 = vmax.f32 %v354, 0.0
    %v477 = vmax.f32 %v359, 0.0
    %v478 = vmax.f32 %v364, 0.0
    %v479 = vmax.f32 %v369, 0.0
    %v480 = vmax.f32 %v374, 0.0
    %v481 = vmax.f32 %v379, 0.0
    %v482 = vmax.f32 %v384, 0.0
    %v483 = vmax.f32 %v389, 0.0
    %v484 = vmax.f32 %v394, 0.0
    %v485 = vmax.f32 %v399, 0.0
    %v486 = vmax.f32 %v404, 0.0
    %v487 = vmax.f32 %v409, 0.0
    %v488 = vmax.f32 %v414, 0.0
    %v489 = vmax.f32 %v419, 0.0
    %v490 = vmax.f32 %v424, 0.0
    %v491 = vmax.f32 %v429, 0.0
    %v492 = vmax.f32 %v434, 0.0
    %v493 = vmax.f32 %v439, 0.0
    %v494 = vmax.f32 %v444, 0.0
    %v495 = vmax.f32 %v449, 0.0
    %v496 = vmax.f32 %v454, 0.0
    %v497 = vmax.f32 %v459, 0.0
    %v498 = vmax.f32 %v464, 0.0
    %v499 = vld [vmem:[#allocation8] sm:$0xff]
    %v500 = vld [vmem:[#allocation8 + $0x8] sm:$0xff]
    %v501 = vld [vmem:[#allocation8 + $0x10] sm:$0xff]
    %v502 = vld [vmem:[#allocation8 + $0x18] sm:$0xff]
    %v503 = vld [vmem:[#allocation8 + $0x20] sm:$0xff]
    %v504 = vld [vmem:[#allocation8 + $0x28] sm:$0xff]
    %v505 = vld [vmem:[#allocation8 + $0x30] sm:$0xff]
    %v506 = vld [vmem:[#allocation8 + $0x38] sm:$0xff]
    %v507 = vld [vmem:[#allocation8 + $0x40] sm:$0xff]
    %v508 = vld [vmem:[#allocation8 + $0x48] sm:$0xff]
    %v509 = vld [vmem:[#allocation8 + $0x50] sm:$0xff]
    %v510 = vld [vmem:[#allocation8 + $0x58] sm:$0xff]
    %v511 = vld [vmem:[#allocation8 + $0x60] sm:$0xff]
    %v512 = vld [vmem:[#allocation8 + $0x68] sm:$0xff]
    %v513 = vld [vmem:[#allocation8 + $0x70] sm:$0xff]
    %v514 = vld [vmem:[#allocation8 + $0x78] sm:$0xff]
    %v515 = vld [vmem:[%s5] sm:$0x1]
    %v517 = vlaneseq
    %v518 = vshrl.u32 %v517, 7
    %v519 = vsub.s32 0, %v518
    %v520 = vrot.slane %v515, %v519
    %522 = vmatprep.subr.mxu0 0.0
    %523 = vmatpush1.msra.mxu0 %v499
    %524 = vmatprep.subr.mxu0 0.0
    %525 = vmatpush1.msra.mxu0 %v500
    %526 = vmatprep.subr.mxu0 0.0
    %527 = vmatpush1.msra.mxu0 %v501
    %528 = vmatprep.subr.mxu0 0.0
    %529 = vmatpush1.msra.mxu0 %v502
    %530 = vmatprep.subr.mxu0 0.0
    %531 = vmatpush1.msra.mxu0 %v503
    %532 = vmatprep.subr.mxu0 0.0
    %533 = vmatpush1.msra.mxu0 %v504
    %534 = vmatprep.subr.mxu0 0.0
    %535 = vmatpush1.msra.mxu0 %v505
    %536 = vmatprep.subr.mxu0 0.0
    %537 = vmatpush1.msra.mxu0 %v506
    %538 = vmatprep.subr.mxu0 0.0
    %539 = vmatpush1.msra.mxu0 %v507
    %540 = vmatprep.subr.mxu0 0.0
    %541 = vmatpush1.msra.mxu0 %v508
    %542 = vmatprep.subr.mxu0 0.0
    %543 = vmatpush1.msra.mxu0 %v509
    %544 = vmatprep.subr.mxu0 0.0
    %545 = vmatpush1.msra.mxu0 %v510
    %546 = vmatprep.subr.mxu0 0.0
    %547 = vmatpush1.msra.mxu0 %v511
    %548 = vmatprep.subr.mxu0 0.0
    %549 = vmatpush1.msra.mxu0 %v512
    %550 = vmatprep.subr.mxu0 0.0
    %551 = vmatpush1.msra.mxu0 %v513
    %552 = vmatprep.subr.mxu0 0.0
    %553 = vmatpush1.msra.mxu0 %v514
    %554 = vmatprep.subr.mxu0 0.0
    %555 = vmatpush1.msra.mxu0 0.0
    %556 = vmatprep.subr.mxu0 0.0
    %557 = vmatpush1.msra.mxu0 0.0
    %558 = vmatprep.subr.mxu0 0.0
    %559 = vmatpush1.msra.mxu0 0.0
    %560 = vmatprep.subr.mxu0 0.0
    %561 = vmatpush1.msra.mxu0 0.0
    %562 = vmatprep.subr.mxu0 0.0
    %563 = vmatpush1.msra.mxu0 0.0
    %564 = vmatprep.subr.mxu0 0.0
    %565 = vmatpush1.msra.mxu0 0.0
    %566 = vmatprep.subr.mxu0 0.0
    %567 = vmatpush1.msra.mxu0 0.0
    %568 = vmatprep.subr.mxu0 0.0
    %569 = vmatpush1.msra.mxu0 0.0
    %570 = vmatprep.subr.mxu0 0.0
    %571 = vmatpush1.msra.mxu0 0.0
    %572 = vmatprep.subr.mxu0 0.0
    %573 = vmatpush1.msra.mxu0 0.0
    %574 = vmatprep.subr.mxu0 0.0
    %575 = vmatpush1.msra.mxu0 0.0
    %576 = vmatprep.subr.mxu0 0.0
    %577 = vmatpush1.msra.mxu0 0.0
    %578 = vmatprep.subr.mxu0 0.0
    %579 = vmatpush1.msra.mxu0 0.0
    %580 = vmatprep.subr.mxu0 0.0
    %581 = vmatpush1.msra.mxu0 0.0
    %582 = vmatprep.subr.mxu0 0.0
    %583 = vmatpush1.msra.mxu0 0.0
    %584 = vmatprep.subr.mxu0 0.0
    %585 = vmatpush1.msra.mxu0 0.0
    %586 = vmatprep.mubr.f32.mxu0 0.0
    %587 = vmatmul.mubr.f32.gmra.mrb[0].mxu0 %v467
    %v588 = vpop.f32.mrb[0].mxu0
    %v589 = vadd.f32 %v520, %v588
    %v590 = vpop.f32.mrb[0].mxu0
    %591 = vmatprep.mubr.f32.mxu0 0.0
    %592 = vmatmul.mubr.f32.gmra.mrb[0].mxu0 %v468
    %v593 = vpop.f32.mrb[0].mxu0
    %v594 = vadd.f32 %v520, %v593
    %v595 = vpop.f32.mrb[0].mxu0
    %596 = vmatprep.mubr.f32.mxu0 0.0
    %597 = vmatmul.mubr.f32.gmra.mrb[0].mxu0 %v469
    %v598 = vpop.f32.mrb[0].mxu0
    %v599 = vadd.f32 %v520, %v598
    %v600 = vpop.f32.mrb[0].mxu0
    %601 = vmatprep.mubr.f32.mxu0 0.0
    %602 = vmatmul.mubr.f32.gmra.mrb[0].mxu0 %v470
    %v603 = vpop.f32.mrb[0].mxu0
    %v604 = vadd.f32 %v520, %v603
    %v605 = vpop.f32.mrb[0].mxu0
    %606 = vmatprep.mubr.f32.mxu0 0.0
    %607 = vmatmul.mubr.f32.gmra.mrb[0].mxu0 %v471
    %v608 = vpop.f32.mrb[0].mxu0
    %v609 = vadd.f32 %v520, %v608
    %v610 = vpop.f32.mrb[0].mxu0
    %611 = vmatprep.mubr.f32.mxu0 0.0
    %612 = vmatmul.mubr.f32.gmra.mrb[0].mxu0 %v472
    %v613 = vpop.f32.mrb[0].mxu0
    %v614 = vadd.f32 %v520, %v613
    %v615 = vpop.f32.mrb[0].mxu0
    %616 = vmatprep.mubr.f32.mxu0 0.0
    %617 = vmatmul.mubr.f32.gmra.mrb[0].mxu0 %v473
    %v618 = vpop.f32.mrb[0].mxu0
    %v619 = vadd.f32 %v520, %v618
    %v620 = vpop.f32.mrb[0].mxu0
    %621 = vmatprep.mubr.f32.mxu0 0.0
    %622 = vmatmul.mubr.f32.gmra.mrb[0].mxu0 %v474
    %v623 = vpop.f32.mrb[0].mxu0
    %v624 = vadd.f32 %v520, %v623
    %v625 = vpop.f32.mrb[0].mxu0
    %626 = vmatprep.mubr.f32.mxu0 0.0
    %627 = vmatmul.mubr.f32.gmra.mrb[0].mxu0 %v475
    %v628 = vpop.f32.mrb[0].mxu0
    %v629 = vadd.f32 %v520, %v628
    %v630 = vpop.f32.mrb[0].mxu0
    %631 = vmatprep.mubr.f32.mxu0 0.0
    %632 = vmatmul.mubr.f32.gmra.mrb[0].mxu0 %v476
    %v633 = vpop.f32.mrb[0].mxu0
    %v634 = vadd.f32 %v520, %v633
    %v635 = vpop.f32.mrb[0].mxu0
    %636 = vmatprep.mubr.f32.mxu0 0.0
    %637 = vmatmul.mubr.f32.gmra.mrb[0].mxu0 %v477
    %v638 = vpop.f32.mrb[0].mxu0
    %v639 = vadd.f32 %v520, %v638
    %v640 = vpop.f32.mrb[0].mxu0
    %641 = vmatprep.mubr.f32.mxu0 0.0
    %642 = vmatmul.mubr.f32.gmra.mrb[0].mxu0 %v478
    %v643 = vpop.f32.mrb[0].mxu0
    %v644 = vadd.f32 %v520, %v643
    %v645 = vpop.f32.mrb[0].mxu0
    %646 = vmatprep.mubr.f32.mxu0 0.0
    %647 = vmatmul.mubr.f32.gmra.mrb[0].mxu0 %v479
    %v648 = vpop.f32.mrb[0].mxu0
    %v649 = vadd.f32 %v520, %v648
    %v650 = vpop.f32.mrb[0].mxu0
    %651 = vmatprep.mubr.f32.mxu0 0.0
    %652 = vmatmul.mubr.f32.gmra.mrb[0].mxu0 %v480
    %v653 = vpop.f32.mrb[0].mxu0
    %v654 = vadd.f32 %v520, %v653
    %v655 = vpop.f32.mrb[0].mxu0
    %656 = vmatprep.mubr.f32.mxu0 0.0
    %657 = vmatmul.mubr.f32.gmra.mrb[0].mxu0 %v481
    %v658 = vpop.f32.mrb[0].mxu0
    %v659 = vadd.f32 %v520, %v658
    %v660 = vpop.f32.mrb[0].mxu0
    %661 = vmatprep.mubr.f32.mxu0 0.0
    %662 = vmatmul.mubr.f32.gmra.mrb[0].mxu0 %v482
    %v663 = vpop.f32.mrb[0].mxu0
    %v664 = vadd.f32 %v520, %v663
    %v665 = vpop.f32.mrb[0].mxu0
    %666 = vmatprep.mubr.f32.mxu0 0.0
    %667 = vmatmul.mubr.f32.gmra.mrb[0].mxu0 %v483
    %v668 = vpop.f32.mrb[0].mxu0
    %v669 = vadd.f32 %v520, %v668
    %v670 = vpop.f32.mrb[0].mxu0
    %671 = vmatprep.mubr.f32.mxu0 0.0
    %672 = vmatmul.mubr.f32.gmra.mrb[0].mxu0 %v484
    %v673 = vpop.f32.mrb[0].mxu0
    %v674 = vadd.f32 %v520, %v673
    %v675 = vpop.f32.mrb[0].mxu0
    %676 = vmatprep.mubr.f32.mxu0 0.0
    %677 = vmatmul.mubr.f32.gmra.mrb[0].mxu0 %v485
    %v678 = vpop.f32.mrb[0].mxu0
    %v679 = vadd.f32 %v520, %v678
    %v680 = vpop.f32.mrb[0].mxu0
    %681 = vmatprep.mubr.f32.mxu0 0.0
    %682 = vmatmul.mubr.f32.gmra.mrb[0].mxu0 %v486
    %v683 = vpop.f32.mrb[0].mxu0
    %v684 = vadd.f32 %v520, %v683
    %v685 = vpop.f32.mrb[0].mxu0
    %686 = vmatprep.mubr.f32.mxu0 0.0
    %687 = vmatmul.mubr.f32.gmra.mrb[0].mxu0 %v487
    %v688 = vpop.f32.mrb[0].mxu0
    %v689 = vadd.f32 %v520, %v688
    %v690 = vpop.f32.mrb[0].mxu0
    %691 = vmatprep.mubr.f32.mxu0 0.0
    %692 = vmatmul.mubr.f32.gmra.mrb[0].mxu0 %v488
    %v693 = vpop.f32.mrb[0].mxu0
    %v694 = vadd.f32 %v520, %v693
    %v695 = vpop.f32.mrb[0].mxu0
    %696 = vmatprep.mubr.f32.mxu0 0.0
    %697 = vmatmul.mubr.f32.gmra.mrb[0].mxu0 %v489
    %v698 = vpop.f32.mrb[0].mxu0
    %v699 = vadd.f32 %v520, %v698
    %v700 = vpop.f32.mrb[0].mxu0
    %701 = vmatprep.mubr.f32.mxu0 0.0
    %702 = vmatmul.mubr.f32.gmra.mrb[0].mxu0 %v490
    %v703 = vpop.f32.mrb[0].mxu0
    %v704 = vadd.f32 %v520, %v703
    %v705 = vpop.f32.mrb[0].mxu0
    %706 = vmatprep.mubr.f32.mxu0 0.0
    %707 = vmatmul.mubr.f32.gmra.mrb[0].mxu0 %v491
    %v708 = vpop.f32.mrb[0].mxu0
    %v709 = vadd.f32 %v520, %v708
    %v710 = vpop.f32.mrb[0].mxu0
    %711 = vmatprep.mubr.f32.mxu0 0.0
    %712 = vmatmul.mubr.f32.gmra.mrb[0].mxu0 %v492
    %v713 = vpop.f32.mrb[0].mxu0
    %v714 = vadd.f32 %v520, %v713
    %v715 = vpop.f32.mrb[0].mxu0
    %716 = vmatprep.mubr.f32.mxu0 0.0
    %717 = vmatmul.mubr.f32.gmra.mrb[0].mxu0 %v493
    %v718 = vpop.f32.mrb[0].mxu0
    %v719 = vadd.f32 %v520, %v718
    %v720 = vpop.f32.mrb[0].mxu0
    %721 = vmatprep.mubr.f32.mxu0 0.0
    %722 = vmatmul.mubr.f32.gmra.mrb[0].mxu0 %v494
    %v723 = vpop.f32.mrb[0].mxu0
    %v724 = vadd.f32 %v520, %v723
    %v725 = vpop.f32.mrb[0].mxu0
    %726 = vmatprep.mubr.f32.mxu0 0.0
    %727 = vmatmul.mubr.f32.gmra.mrb[0].mxu0 %v495
    %v728 = vpop.f32.mrb[0].mxu0
    %v729 = vadd.f32 %v520, %v728
    %v730 = vpop.f32.mrb[0].mxu0
    %731 = vmatprep.mubr.f32.mxu0 0.0
    %732 = vmatmul.mubr.f32.gmra.mrb[0].mxu0 %v496
    %v733 = vpop.f32.mrb[0].mxu0
    %v734 = vadd.f32 %v520, %v733
    %v735 = vpop.f32.mrb[0].mxu0
    %736 = vmatprep.mubr.f32.mxu0 0.0
    %737 = vmatmul.mubr.f32.gmra.mrb[0].mxu0 %v497
    %v738 = vpop.f32.mrb[0].mxu0
    %v739 = vadd.f32 %v520, %v738
    %v740 = vpop.f32.mrb[0].mxu0
    %741 = vmatprep.mubr.f32.mxu0 0.0
    %742 = vmatmul.mubr.f32.gmra.mrb[0].mxu0 %v498
    %v743 = vpop.f32.mrb[0].mxu0
    %v744 = vadd.f32 %v520, %v743
    %v745 = vpop.f32.mrb[0].mxu0
    %746 = vdwg.mxu0
    %v747 = vmax.f32 %v589, 0.0
    %v748 = vmax.f32 %v594, 0.0
    %v749 = vmax.f32 %v599, 0.0
    %v750 = vmax.f32 %v604, 0.0
    %v751 = vmax.f32 %v609, 0.0
    %v752 = vmax.f32 %v614, 0.0
    %v753 = vmax.f32 %v619, 0.0
    %v754 = vmax.f32 %v624, 0.0
    %v755 = vmax.f32 %v629, 0.0
    %v756 = vmax.f32 %v634, 0.0
    %v757 = vmax.f32 %v639, 0.0
    %v758 = vmax.f32 %v644, 0.0
    %v759 = vmax.f32 %v649, 0.0
    %v760 = vmax.f32 %v654, 0.0
    %v761 = vmax.f32 %v659, 0.0
    %v762 = vmax.f32 %v664, 0.0
    %v763 = vmax.f32 %v669, 0.0
    %v764 = vmax.f32 %v674, 0.0
    %v765 = vmax.f32 %v679, 0.0
    %v766 = vmax.f32 %v684, 0.0
    %v767 = vmax.f32 %v689, 0.0
    %v768 = vmax.f32 %v694, 0.0
    %v769 = vmax.f32 %v699, 0.0
    %v770 = vmax.f32 %v704, 0.0
    %v771 = vmax.f32 %v709, 0.0
    %v772 = vmax.f32 %v714, 0.0
    %v773 = vmax.f32 %v719, 0.0
    %v774 = vmax.f32 %v724, 0.0
    %v775 = vmax.f32 %v729, 0.0
    %v776 = vmax.f32 %v734, 0.0
    %v777 = vmax.f32 %v739, 0.0
    %v778 = vmax.f32 %v744, 0.0
    %v779 = vld [vmem:[#allocation10] sm:$0xff]
    %v780 = vld [vmem:[#allocation10 + $0x8] sm:$0xff]
    %v781 = vld [vmem:[#allocation10 + $0x10] sm:$0xff]
    %v782 = vld [vmem:[#allocation10 + $0x18] sm:$0xff]
    %v783 = vld [vmem:[#allocation10 + $0x20] sm:$0xff]
    %v784 = vld [vmem:[#allocation10 + $0x28] sm:$0xff]
    %v785 = vld [vmem:[#allocation10 + $0x30] sm:$0xff]
    %v786 = vld [vmem:[#allocation10 + $0x38] sm:$0xff]
    %v787 = vld [vmem:[#allocation10 + $0x40] sm:$0xff]
    %v788 = vld [vmem:[#allocation10 + $0x48] sm:$0xff]
    %v789 = vld [vmem:[#allocation10 + $0x50] sm:$0xff]
    %v790 = vld [vmem:[#allocation10 + $0x58] sm:$0xff]
    %v791 = vld [vmem:[#allocation10 + $0x60] sm:$0xff]
    %v792 = vld [vmem:[#allocation10 + $0x68] sm:$0xff]
    %v793 = vld [vmem:[#allocation10 + $0x70] sm:$0xff]
    %v794 = vld [vmem:[#allocation10 + $0x78] sm:$0xff]
    %v795 = vld [vmem:[#allocation10 + $0x80] sm:$0xff]
    %v796 = vld [vmem:[#allocation10 + $0x88] sm:$0xff]
    %v797 = vld [vmem:[#allocation10 + $0x90] sm:$0xff]
    %v798 = vld [vmem:[#allocation10 + $0x98] sm:$0xff]
    %v799 = vld [vmem:[#allocation10 + $0xa0] sm:$0xff]
    %v800 = vld [vmem:[#allocation10 + $0xa8] sm:$0xff]
    %v801 = vld [vmem:[#allocation10 + $0xb0] sm:$0xff]
    %v802 = vld [vmem:[#allocation10 + $0xb8] sm:$0xff]
    %v803 = vld [vmem:[#allocation10 + $0xc0] sm:$0xff]
    %v804 = vld [vmem:[#allocation10 + $0xc8] sm:$0xff]
    %v805 = vld [vmem:[#allocation10 + $0xd0] sm:$0xff]
    %v806 = vld [vmem:[#allocation10 + $0xd8] sm:$0xff]
    %v807 = vld [vmem:[#allocation10 + $0xe0] sm:$0xff]
    %v808 = vld [vmem:[#allocation10 + $0xe8] sm:$0xff]
    %v809 = vld [vmem:[#allocation10 + $0xf0] sm:$0xff]
    %v810 = vld [vmem:[#allocation10 + $0xf8] sm:$0xff]
    %v811 = vld [vmem:[%s7] sm:$0x3]
    %v813 = vlaneseq
    %v814 = vshrl.u32 %v813, 7
    %v815 = vsub.s32 0, %v814
    %v816 = vrot.slane %v811, %v815
    %v817 = vlaneseq
    %v818 = vshrl.u32 %v817, 7
    %v819 = vsub.s32 1, %v818
    %v820 = vrot.slane %v811, %v819
    %823 = vmatprep.subr.mxu0 %v780
    %824 = vmatpush1.msra.mxu0 %v779
    %825 = vmatprep.subr.mxu0 %v782
    %826 = vmatpush1.msra.mxu0 %v781
    %827 = vmatprep.subr.mxu0 %v784
    %828 = vmatpush1.msra.mxu0 %v783
    %829 = vmatprep.subr.mxu0 %v786
    %830 = vmatpush1.msra.mxu0 %v785
    %831 = vmatprep.subr.mxu0 %v788
    %832 = vmatpush1.msra.mxu0 %v787
    %833 = vmatprep.subr.mxu0 %v790
    %834 = vmatpush1.msra.mxu0 %v789
    %835 = vmatprep.subr.mxu0 %v792
    %836 = vmatpush1.msra.mxu0 %v791
    %837 = vmatprep.subr.mxu0 %v794
    %838 = vmatpush1.msra.mxu0 %v793
    %839 = vmatprep.subr.mxu0 %v796
    %840 = vmatpush1.msra.mxu0 %v795
    %841 = vmatprep.subr.mxu0 %v798
    %842 = vmatpush1.msra.mxu0 %v797
    %843 = vmatprep.subr.mxu0 %v800
    %844 = vmatpush1.msra.mxu0 %v799
    %845 = vmatprep.subr.mxu0 %v802
    %846 = vmatpush1.msra.mxu0 %v801
    %847 = vmatprep.subr.mxu0 %v804
    %848 = vmatpush1.msra.mxu0 %v803
    %849 = vmatprep.subr.mxu0 %v806
    %850 = vmatpush1.msra.mxu0 %v805
    %851 = vmatprep.subr.mxu0 %v808
    %852 = vmatpush1.msra.mxu0 %v807
    %853 = vmatprep.subr.mxu0 %v810
    %854 = vmatpush1.msra.mxu0 %v809
    %855 = vmatprep.subr.mxu0 0.0
    %856 = vmatpush1.msra.mxu0 0.0
    %857 = vmatprep.subr.mxu0 0.0
    %858 = vmatpush1.msra.mxu0 0.0
    %859 = vmatprep.subr.mxu0 0.0
    %860 = vmatpush1.msra.mxu0 0.0
    %861 = vmatprep.subr.mxu0 0.0
    %862 = vmatpush1.msra.mxu0 0.0
    %863 = vmatprep.subr.mxu0 0.0
    %864 = vmatpush1.msra.mxu0 0.0
    %865 = vmatprep.subr.mxu0 0.0
    %866 = vmatpush1.msra.mxu0 0.0
    %867 = vmatprep.subr.mxu0 0.0
    %868 = vmatpush1.msra.mxu0 0.0
    %869 = vmatprep.subr.mxu0 0.0
    %870 = vmatpush1.msra.mxu0 0.0
    %871 = vmatprep.subr.mxu0 0.0
    %872 = vmatpush1.msra.mxu0 0.0
    %873 = vmatprep.subr.mxu0 0.0
    %874 = vmatpush1.msra.mxu0 0.0
    %875 = vmatprep.subr.mxu0 0.0
    %876 = vmatpush1.msra.mxu0 0.0
    %877 = vmatprep.subr.mxu0 0.0
    %878 = vmatpush1.msra.mxu0 0.0
    %879 = vmatprep.subr.mxu0 0.0
    %880 = vmatpush1.msra.mxu0 0.0
    %881 = vmatprep.subr.mxu0 0.0
    %882 = vmatpush1.msra.mxu0 0.0
    %883 = vmatprep.subr.mxu0 0.0
    %884 = vmatpush1.msra.mxu0 0.0
    %885 = vmatprep.subr.mxu0 0.0
    %886 = vmatpush1.msra.mxu0 0.0
    %887 = vmatprep.mubr.f32.mxu0 0.0
    %888 = vmatmul.mubr.f32.gmra.mrb[0].mxu0 %v747
    %v889 = vpop.f32.mrb[0].mxu0
    %v890 = vadd.f32 %v816, %v889
    %v891 = vpop.f32.mrb[0].mxu0
    %v892 = vadd.f32 %v820, %v891
    %893 = vmatprep.mubr.f32.mxu0 0.0
    %894 = vmatmul.mubr.f32.gmra.mrb[0].mxu0 %v748
    %v895 = vpop.f32.mrb[0].mxu0
    %v896 = vadd.f32 %v816, %v895
    %v897 = vpop.f32.mrb[0].mxu0
    %v898 = vadd.f32 %v820, %v897
    %899 = vmatprep.mubr.f32.mxu0 0.0
    %900 = vmatmul.mubr.f32.gmra.mrb[0].mxu0 %v749
    %v901 = vpop.f32.mrb[0].mxu0
    %v902 = vadd.f32 %v816, %v901
    %v903 = vpop.f32.mrb[0].mxu0
    %v904 = vadd.f32 %v820, %v903
    %905 = vmatprep.mubr.f32.mxu0 0.0
    %906 = vmatmul.mubr.f32.gmra.mrb[0].mxu0 %v750
    %v907 = vpop.f32.mrb[0].mxu0
    %v908 = vadd.f32 %v816, %v907
    %v909 = vpop.f32.mrb[0].mxu0
    %v910 = vadd.f32 %v820, %v909
    %911 = vmatprep.mubr.f32.mxu0 0.0
    %912 = vmatmul.mubr.f32.gmra.mrb[0].mxu0 %v751
    %v913 = vpop.f32.mrb[0].mxu0
    %v914 = vadd.f32 %v816, %v913
    %v915 = vpop.f32.mrb[0].mxu0
    %v916 = vadd.f32 %v820, %v915
    %917 = vmatprep.mubr.f32.mxu0 0.0
    %918 = vmatmul.mubr.f32.gmra.mrb[0].mxu0 %v752
    %v919 = vpop.f32.mrb[0].mxu0
    %v920 = vadd.f32 %v816, %v919
    %v921 = vpop.f32.mrb[0].mxu0
    %v922 = vadd.f32 %v820, %v921
    %923 = vmatprep.mubr.f32.mxu0 0.0
    %924 = vmatmul.mubr.f32.gmra.mrb[0].mxu0 %v753
    %v925 = vpop.f32.mrb[0].mxu0
    %v926 = vadd.f32 %v816, %v925
    %v927 = vpop.f32.mrb[0].mxu0
    %v928 = vadd.f32 %v820, %v927
    %929 = vmatprep.mubr.f32.mxu0 0.0
    %930 = vmatmul.mubr.f32.gmra.mrb[0].mxu0 %v754
    %v931 = vpop.f32.mrb[0].mxu0
    %v932 = vadd.f32 %v816, %v931
    %v933 = vpop.f32.mrb[0].mxu0
    %v934 = vadd.f32 %v820, %v933
    %935 = vmatprep.mubr.f32.mxu0 0.0
    %936 = vmatmul.mubr.f32.gmra.mrb[0].mxu0 %v755
    %v937 = vpop.f32.mrb[0].mxu0
    %v938 = vadd.f32 %v816, %v937
    %v939 = vpop.f32.mrb[0].mxu0
    %v940 = vadd.f32 %v820, %v939
    %941 = vmatprep.mubr.f32.mxu0 0.0
    %942 = vmatmul.mubr.f32.gmra.mrb[0].mxu0 %v756
    %v943 = vpop.f32.mrb[0].mxu0
    %v944 = vadd.f32 %v816, %v943
    %v945 = vpop.f32.mrb[0].mxu0
    %v946 = vadd.f32 %v820, %v945
    %947 = vmatprep.mubr.f32.mxu0 0.0
    %948 = vmatmul.mubr.f32.gmra.mrb[0].mxu0 %v757
    %v949 = vpop.f32.mrb[0].mxu0
    %v950 = vadd.f32 %v816, %v949
    %v951 = vpop.f32.mrb[0].mxu0
    %v952 = vadd.f32 %v820, %v951
    %953 = vmatprep.mubr.f32.mxu0 0.0
    %954 = vmatmul.mubr.f32.gmra.mrb[0].mxu0 %v758
    %v955 = vpop.f32.mrb[0].mxu0
    %v956 = vadd.f32 %v816, %v955
    %v957 = vpop.f32.mrb[0].mxu0
    %v958 = vadd.f32 %v820, %v957
    %959 = vmatprep.mubr.f32.mxu0 0.0
    %960 = vmatmul.mubr.f32.gmra.mrb[0].mxu0 %v759
    %v961 = vpop.f32.mrb[0].mxu0
    %v962 = vadd.f32 %v816, %v961
    %v963 = vpop.f32.mrb[0].mxu0
    %v964 = vadd.f32 %v820, %v963
    %965 = vmatprep.mubr.f32.mxu0 0.0
    %966 = vmatmul.mubr.f32.gmra.mrb[0].mxu0 %v760
    %v967 = vpop.f32.mrb[0].mxu0
    %v968 = vadd.f32 %v816, %v967
    %v969 = vpop.f32.mrb[0].mxu0
    %v970 = vadd.f32 %v820, %v969
    %971 = vmatprep.mubr.f32.mxu0 0.0
    %972 = vmatmul.mubr.f32.gmra.mrb[0].mxu0 %v761
    %v973 = vpop.f32.mrb[0].mxu0
    %v974 = vadd.f32 %v816, %v973
    %v975 = vpop.f32.mrb[0].mxu0
    %v976 = vadd.f32 %v820, %v975
    %977 = vmatprep.mubr.f32.mxu0 0.0
    %978 = vmatmul.mubr.f32.gmra.mrb[0].mxu0 %v762
    %v979 = vpop.f32.mrb[0].mxu0
    %v980 = vadd.f32 %v816, %v979
    %v981 = vpop.f32.mrb[0].mxu0
    %v982 = vadd.f32 %v820, %v981
    %983 = vmatprep.mubr.f32.mxu0 0.0
    %984 = vmatmul.mubr.f32.gmra.mrb[0].mxu0 %v763
    %v985 = vpop.f32.mrb[0].mxu0
    %v986 = vadd.f32 %v816, %v985
    %v987 = vpop.f32.mrb[0].mxu0
    %v988 = vadd.f32 %v820, %v987
    %989 = vmatprep.mubr.f32.mxu0 0.0
    %990 = vmatmul.mubr.f32.gmra.mrb[0].mxu0 %v764
    %v991 = vpop.f32.mrb[0].mxu0
    %v992 = vadd.f32 %v816, %v991
    %v993 = vpop.f32.mrb[0].mxu0
    %v994 = vadd.f32 %v820, %v993
    %995 = vmatprep.mubr.f32.mxu0 0.0
    %996 = vmatmul.mubr.f32.gmra.mrb[0].mxu0 %v765
    %v997 = vpop.f32.mrb[0].mxu0
    %v998 = vadd.f32 %v816, %v997
    %v999 = vpop.f32.mrb[0].mxu0
    %v1000 = vadd.f32 %v820, %v999
    %1001 = vmatprep.mubr.f32.mxu0 0.0
    %1002 = vmatmul.mubr.f32.gmra.mrb[0].mxu0 %v766
    %v1003 = vpop.f32.mrb[0].mxu0
    %v1004 = vadd.f32 %v816, %v1003
    %v1005 = vpop.f32.mrb[0].mxu0
    %v1006 = vadd.f32 %v820, %v1005
    %1007 = vmatprep.mubr.f32.mxu0 0.0
    %1008 = vmatmul.mubr.f32.gmra.mrb[0].mxu0 %v767
    %v1009 = vpop.f32.mrb[0].mxu0
    %v1010 = vadd.f32 %v816, %v1009
    %v1011 = vpop.f32.mrb[0].mxu0
    %v1012 = vadd.f32 %v820, %v1011
    %1013 = vmatprep.mubr.f32.mxu0 0.0
    %1014 = vmatmul.mubr.f32.gmra.mrb[0].mxu0 %v768
    %v1015 = vpop.f32.mrb[0].mxu0
    %v1016 = vadd.f32 %v816, %v1015
    %v1017 = vpop.f32.mrb[0].mxu0
    %v1018 = vadd.f32 %v820, %v1017
    %1019 = vmatprep.mubr.f32.mxu0 0.0
    %1020 = vmatmul.mubr.f32.gmra.mrb[0].mxu0 %v769
    %v1021 = vpop.f32.mrb[0].mxu0
    %v1022 = vadd.f32 %v816, %v1021
    %v1023 = vpop.f32.mrb[0].mxu0
    %v1024 = vadd.f32 %v820, %v1023
    %1025 = vmatprep.mubr.f32.mxu0 0.0
    %1026 = vmatmul.mubr.f32.gmra.mrb[0].mxu0 %v770
    %v1027 = vpop.f32.mrb[0].mxu0
    %v1028 = vadd.f32 %v816, %v1027
    %v1029 = vpop.f32.mrb[0].mxu0
    %v1030 = vadd.f32 %v820, %v1029
    %1031 = vmatprep.mubr.f32.mxu0 0.0
    %1032 = vmatmul.mubr.f32.gmra.mrb[0].mxu0 %v771
    %v1033 = vpop.f32.mrb[0].mxu0
    %v1034 = vadd.f32 %v816, %v1033
    %v1035 = vpop.f32.mrb[0].mxu0
    %v1036 = vadd.f32 %v820, %v1035
    %1037 = vmatprep.mubr.f32.mxu0 0.0
    %1038 = vmatmul.mubr.f32.gmra.mrb[0].mxu0 %v772
    %v1039 = vpop.f32.mrb[0].mxu0
    %v1040 = vadd.f32 %v816, %v1039
    %v1041 = vpop.f32.mrb[0].mxu0
    %v1042 = vadd.f32 %v820, %v1041
    %1043 = vmatprep.mubr.f32.mxu0 0.0
    %1044 = vmatmul.mubr.f32.gmra.mrb[0].mxu0 %v773
    %v1045 = vpop.f32.mrb[0].mxu0
    %v1046 = vadd.f32 %v816, %v1045
    %v1047 = vpop.f32.mrb[0].mxu0
    %v1048 = vadd.f32 %v820, %v1047
    %1049 = vmatprep.mubr.f32.mxu0 0.0
    %1050 = vmatmul.mubr.f32.gmra.mrb[0].mxu0 %v774
    %v1051 = vpop.f32.mrb[0].mxu0
    %v1052 = vadd.f32 %v816, %v1051
    %v1053 = vpop.f32.mrb[0].mxu0
    %v1054 = vadd.f32 %v820, %v1053
    %1055 = vmatprep.mubr.f32.mxu0 0.0
    %1056 = vmatmul.mubr.f32.gmra.mrb[0].mxu0 %v775
    %v1057 = vpop.f32.mrb[0].mxu0
    %v1058 = vadd.f32 %v816, %v1057
    %v1059 = vpop.f32.mrb[0].mxu0
    %v1060 = vadd.f32 %v820, %v1059
    %1061 = vmatprep.mubr.f32.mxu0 0.0
    %1062 = vmatmul.mubr.f32.gmra.mrb[0].mxu0 %v776
    %v1063 = vpop.f32.mrb[0].mxu0
    %v1064 = vadd.f32 %v816, %v1063
    %v1065 = vpop.f32.mrb[0].mxu0
    %v1066 = vadd.f32 %v820, %v1065
    %1067 = vmatprep.mubr.f32.mxu0 0.0
    %1068 = vmatmul.mubr.f32.gmra.mrb[0].mxu0 %v777
    %v1069 = vpop.f32.mrb[0].mxu0
    %v1070 = vadd.f32 %v816, %v1069
    %v1071 = vpop.f32.mrb[0].mxu0
    %v1072 = vadd.f32 %v820, %v1071
    %1073 = vmatprep.mubr.f32.mxu0 0.0
    %1074 = vmatmul.mubr.f32.gmra.mrb[0].mxu0 %v778
    %v1075 = vpop.f32.mrb[0].mxu0
    %v1076 = vadd.f32 %v816, %v1075
    %v1077 = vpop.f32.mrb[0].mxu0
    %v1078 = vadd.f32 %v820, %v1077
    %1079 = vdwg.mxu0
    %1080 = vst [vmem:[%s13] sm:$0xff] %v890
    %1081 = vst [vmem:[%s13 + $0x8] sm:$0xff] %v892
    %1082 = vst [vmem:[%s13 + $0x10] sm:$0xff] %v896
    %1083 = vst [vmem:[%s13 + $0x18] sm:$0xff] %v898
    %1084 = vst [vmem:[%s13 + $0x20] sm:$0xff] %v902
    %1085 = vst [vmem:[%s13 + $0x28] sm:$0xff] %v904
    %1086 = vst [vmem:[%s13 + $0x30] sm:$0xff] %v908
    %1087 = vst [vmem:[%s13 + $0x38] sm:$0xff] %v910
    %1088 = vst [vmem:[%s13 + $0x40] sm:$0xff] %v914
    %1089 = vst [vmem:[%s13 + $0x48] sm:$0xff] %v916
    %1090 = vst [vmem:[%s13 + $0x50] sm:$0xff] %v920
    %1091 = vst [vmem:[%s13 + $0x58] sm:$0xff] %v922
    %1092 = vst [vmem:[%s13 + $0x60] sm:$0xff] %v926
    %1093 = vst [vmem:[%s13 + $0x68] sm:$0xff] %v928
    %1094 = vst [vmem:[%s13 + $0x70] sm:$0xff] %v932
    %1095 = vst [vmem:[%s13 + $0x78] sm:$0xff] %v934
    %1096 = vst [vmem:[%s13 + $0x80] sm:$0xff] %v938
    %1097 = vst [vmem:[%s13 + $0x88] sm:$0xff] %v940
    %1098 = vst [vmem:[%s13 + $0x90] sm:$0xff] %v944
    %1099 = vst [vmem:[%s13 + $0x98] sm:$0xff] %v946
    %1100 = vst [vmem:[%s13 + $0xa0] sm:$0xff] %v950
    %1101 = vst [vmem:[%s13 + $0xa8] sm:$0xff] %v952
    %1102 = vst [vmem:[%s13 + $0xb0] sm:$0xff] %v956
    %1103 = vst [vmem:[%s13 + $0xb8] sm:$0xff] %v958
    %1104 = vst [vmem:[%s13 + $0xc0] sm:$0xff] %v962
    %1105 = vst [vmem:[%s13 + $0xc8] sm:$0xff] %v964
    %1106 = vst [vmem:[%s13 + $0xd0] sm:$0xff] %v968
    %1107 = vst [vmem:[%s13 + $0xd8] sm:$0xff] %v970
    %1108 = vst [vmem:[%s13 + $0xe0] sm:$0xff] %v974
    %1109 = vst [vmem:[%s13 + $0xe8] sm:$0xff] %v976
    %1110 = vst [vmem:[%s13 + $0xf0] sm:$0xff] %v980
    %1111 = vst [vmem:[%s13 + $0xf8] sm:$0xff] %v982
    %1112 = vst [vmem:[%s13 + $0x100] sm:$0xff] %v986
    %1113 = vst [vmem:[%s13 + $0x108] sm:$0xff] %v988
    %1114 = vst [vmem:[%s13 + $0x110] sm:$0xff] %v992
    %1115 = vst [vmem:[%s13 + $0x118] sm:$0xff] %v994
    %1116 = vst [vmem:[%s13 + $0x120] sm:$0xff] %v998
    %1117 = vst [vmem:[%s13 + $0x128] sm:$0xff] %v1000
    %1118 = vst [vmem:[%s13 + $0x130] sm:$0xff] %v1004
    %1119 = vst [vmem:[%s13 + $0x138] sm:$0xff] %v1006
    %1120 = vst [vmem:[%s13 + $0x140] sm:$0xff] %v1010
    %1121 = vst [vmem:[%s13 + $0x148] sm:$0xff] %v1012
    %1122 = vst [vmem:[%s13 + $0x150] sm:$0xff] %v1016
    %1123 = vst [vmem:[%s13 + $0x158] sm:$0xff] %v1018
    %1124 = vst [vmem:[%s13 + $0x160] sm:$0xff] %v1022
    %1125 = vst [vmem:[%s13 + $0x168] sm:$0xff] %v1024
    %1126 = vst [vmem:[%s13 + $0x170] sm:$0xff] %v1028
    %1127 = vst [vmem:[%s13 + $0x178] sm:$0xff] %v1030
    %1128 = vst [vmem:[%s13 + $0x180] sm:$0xff] %v1034
    %1129 = vst [vmem:[%s13 + $0x188] sm:$0xff] %v1036
    %1130 = vst [vmem:[%s13 + $0x190] sm:$0xff] %v1040
    %1131 = vst [vmem:[%s13 + $0x198] sm:$0xff] %v1042
    %1132 = vst [vmem:[%s13 + $0x1a0] sm:$0xff] %v1046
    %1133 = vst [vmem:[%s13 + $0x1a8] sm:$0xff] %v1048
    %1134 = vst [vmem:[%s13 + $0x1b0] sm:$0xff] %v1052
    %1135 = vst [vmem:[%s13 + $0x1b8] sm:$0xff] %v1054
    %1136 = vst [vmem:[%s13 + $0x1c0] sm:$0xff] %v1058
    %1137 = vst [vmem:[%s13 + $0x1c8] sm:$0xff] %v1060
    %1138 = vst [vmem:[%s13 + $0x1d0] sm:$0xff] %v1064
    %1139 = vst [vmem:[%s13 + $0x1d8] sm:$0xff] %v1066
    %1140 = vst [vmem:[%s13 + $0x1e0] sm:$0xff] %v1070
    %1141 = vst [vmem:[%s13 + $0x1e8] sm:$0xff] %v1072
    %1142 = vst [vmem:[%s13 + $0x1f0] sm:$0xff] %v1076
    %1143 = vst [vmem:[%s13 + $0x1f8] sm:$0xff] %v1078
    %v1144 = vld [vmem:[#allocation5] sm:$0xff]
    %v1145 = vld [vmem:[#allocation5 + $0x8] sm:$0xff]
    %v1146 = vld [vmem:[#allocation5 + $0x10] sm:$0xff]
    %v1147 = vld [vmem:[#allocation5 + $0x18] sm:$0xff]
    %v1148 = vld [vmem:[#allocation5 + $0x20] sm:$0xff]
    %v1149 = vld [vmem:[#allocation5 + $0x28] sm:$0xff]
    %v1150 = vld [vmem:[#allocation5 + $0x30] sm:$0xff]
    %v1151 = vld [vmem:[#allocation5 + $0x38] sm:$0xff]
    %v1152 = vld [vmem:[#allocation5 + $0x40] sm:$0xff]
    %v1153 = vld [vmem:[#allocation5 + $0x48] sm:$0xff]
    %v1154 = vld [vmem:[#allocation5 + $0x50] sm:$0xff]
    %v1155 = vld [vmem:[#allocation5 + $0x58] sm:$0xff]
    %v1156 = vld [vmem:[#allocation5 + $0x60] sm:$0xff]
    %v1157 = vld [vmem:[#allocation5 + $0x68] sm:$0xff]
    %v1158 = vld [vmem:[#allocation5 + $0x70] sm:$0xff]
    %v1159 = vld [vmem:[#allocation5 + $0x78] sm:$0xff]
    %v1160 = vld [vmem:[#allocation5 + $0x80] sm:$0xff]
    %v1161 = vld [vmem:[#allocation5 + $0x88] sm:$0xff]
    %v1162 = vld [vmem:[#allocation5 + $0x90] sm:$0xff]
    %v1163 = vld [vmem:[#allocation5 + $0x98] sm:$0xff]
    %v1164 = vld [vmem:[#allocation5 + $0xa0] sm:$0xff]
    %v1165 = vld [vmem:[#allocation5 + $0xa8] sm:$0xff]
    %v1166 = vld [vmem:[#allocation5 + $0xb0] sm:$0xff]
    %v1167 = vld [vmem:[#allocation5 + $0xb8] sm:$0xff]
    %v1168 = vld [vmem:[#allocation5 + $0xc0] sm:$0xff]
    %v1169 = vld [vmem:[#allocation5 + $0xc8] sm:$0xff]
    %v1170 = vld [vmem:[#allocation5 + $0xd0] sm:$0xff]
    %v1171 = vld [vmem:[#allocation5 + $0xd8] sm:$0xff]
    %v1172 = vld [vmem:[#allocation5 + $0xe0] sm:$0xff]
    %v1173 = vld [vmem:[#allocation5 + $0xe8] sm:$0xff]
    %v1174 = vld [vmem:[#allocation5 + $0xf0] sm:$0xff]
    %v1175 = vld [vmem:[#allocation5 + $0xf8] sm:$0xff]
    %v1176 = vmul.f32 %v892, 0.5
    %v1177 = vmul.f32 %v898, 0.5
    %v1178 = vmul.f32 %v904, 0.5
    %v1179 = vmul.f32 %v910, 0.5
    %v1180 = vmul.f32 %v916, 0.5
    %v1181 = vmul.f32 %v922, 0.5
    %v1182 = vmul.f32 %v928, 0.5
    %v1183 = vmul.f32 %v934, 0.5
    %v1184 = vmul.f32 %v940, 0.5
    %v1185 = vmul.f32 %v946, 0.5
    %v1186 = vmul.f32 %v952, 0.5
    %v1187 = vmul.f32 %v958, 0.5
    %v1188 = vmul.f32 %v964, 0.5
    %v1189 = vmul.f32 %v970, 0.5
    %v1190 = vmul.f32 %v976, 0.5
    %v1191 = vmul.f32 %v982, 0.5
    %v1192 = vmul.f32 %v988, 0.5
    %v1193 = vmul.f32 %v994, 0.5
    %v1194 = vmul.f32 %v1000, 0.5
    %v1195 = vmul.f32 %v1006, 0.5
    %v1196 = vmul.f32 %v1012, 0.5
    %v1197 = vmul.f32 %v1018, 0.5
    %v1198 = vmul.f32 %v1024, 0.5
    %v1199 = vmul.f32 %v1030, 0.5
    %v1200 = vmul.f32 %v1036, 0.5
    %v1201 = vmul.f32 %v1042, 0.5
    %v1202 = vmul.f32 %v1048, 0.5
    %v1203 = vmul.f32 %v1054, 0.5
    %v1204 = vmul.f32 %v1060, 0.5
    %v1205 = vmul.f32 %v1066, 0.5
    %v1206 = vmul.f32 %v1072, 0.5
    %v1207 = vmul.f32 %v1078, 0.5
    %v1208 = vmul.f32 %v1176, 1.442695
    %v1209 = vpow.pop %v1208
    %v1210 = vmul.f32 %v1177, 1.442695
    %v1211 = vpow.pop %v1210
    %v1212 = vmul.f32 %v1178, 1.442695
    %v1213 = vpow.pop %v1212
    %v1214 = vmul.f32 %v1179, 1.442695
    %v1215 = vpow.pop %v1214
    %v1216 = vmul.f32 %v1180, 1.442695
    %v1217 = vpow.pop %v1216
    %v1218 = vmul.f32 %v1181, 1.442695
    %v1219 = vpow.pop %v1218
    %v1220 = vmul.f32 %v1182, 1.442695
    %v1221 = vpow.pop %v1220
    %v1222 = vmul.f32 %v1183, 1.442695
    %v1223 = vpow.pop %v1222
    %v1224 = vmul.f32 %v1184, 1.442695
    %v1225 = vpow.pop %v1224
    %v1226 = vmul.f32 %v1185, 1.442695
    %v1227 = vpow.pop %v1226
    %v1228 = vmul.f32 %v1186, 1.442695
    %v1229 = vpow.pop %v1228
    %v1230 = vmul.f32 %v1187, 1.442695
    %v1231 = vpow.pop %v1230
    %v1232 = vmul.f32 %v1188, 1.442695
    %v1233 = vpow.pop %v1232
    %v1234 = vmul.f32 %v1189, 1.442695
    %v1235 = vpow.pop %v1234
    %v1236 = vmul.f32 %v1190, 1.442695
    %v1237 = vpow.pop %v1236
    %v1238 = vmul.f32 %v1191, 1.442695
    %v1239 = vpow.pop %v1238
    %v1240 = vmul.f32 %v1192, 1.442695
    %v1241 = vpow.pop %v1240
    %v1242 = vmul.f32 %v1193, 1.442695
    %v1243 = vpow.pop %v1242
    %v1244 = vmul.f32 %v1194, 1.442695
    %v1245 = vpow.pop %v1244
    %v1246 = vmul.f32 %v1195, 1.442695
    %v1247 = vpow.pop %v1246
    %v1248 = vmul.f32 %v1196, 1.442695
    %v1249 = vpow.pop %v1248
    %v1250 = vmul.f32 %v1197, 1.442695
    %v1251 = vpow.pop %v1250
    %v1252 = vmul.f32 %v1198, 1.442695
    %v1253 = vpow.pop %v1252
    %v1254 = vmul.f32 %v1199, 1.442695
    %v1255 = vpow.pop %v1254
    %v1256 = vmul.f32 %v1200, 1.442695
    %v1257 = vpow.pop %v1256
    %v1258 = vmul.f32 %v1201, 1.442695
    %v1259 = vpow.pop %v1258
    %v1260 = vmul.f32 %v1202, 1.442695
    %v1261 = vpow.pop %v1260
    %v1262 = vmul.f32 %v1203, 1.442695
    %v1263 = vpow.pop %v1262
    %v1264 = vmul.f32 %v1204, 1.442695
    %v1265 = vpow.pop %v1264
    %v1266 = vmul.f32 %v1205, 1.442695
    %v1267 = vpow.pop %v1266
    %v1268 = vmul.f32 %v1206, 1.442695
    %v1269 = vpow.pop %v1268
    %v1270 = vmul.f32 %v1207, 1.442695
    %v1271 = vpow.pop %v1270
    %v1272 = vmul.f32 %v1144, %v1209
    %v1273 = vmul.f32 %v1145, %v1211
    %v1274 = vmul.f32 %v1146, %v1213
    %v1275 = vmul.f32 %v1147, %v1215
    %v1276 = vmul.f32 %v1148, %v1217
    %v1277 = vmul.f32 %v1149, %v1219
    %v1278 = vmul.f32 %v1150, %v1221
    %v1279 = vmul.f32 %v1151, %v1223
    %v1280 = vmul.f32 %v1152, %v1225
    %v1281 = vmul.f32 %v1153, %v1227
    %v1282 = vmul.f32 %v1154, %v1229
    %v1283 = vmul.f32 %v1155, %v1231
    %v1284 = vmul.f32 %v1156, %v1233
    %v1285 = vmul.f32 %v1157, %v1235
    %v1286 = vmul.f32 %v1158, %v1237
    %v1287 = vmul.f32 %v1159, %v1239
    %v1288 = vmul.f32 %v1160, %v1241
    %v1289 = vmul.f32 %v1161, %v1243
    %v1290 = vmul.f32 %v1162, %v1245
    %v1291 = vmul.f32 %v1163, %v1247
    %v1292 = vmul.f32 %v1164, %v1249
    %v1293 = vmul.f32 %v1165, %v1251
    %v1294 = vmul.f32 %v1166, %v1253
    %v1295 = vmul.f32 %v1167, %v1255
    %v1296 = vmul.f32 %v1168, %v1257
    %v1297 = vmul.f32 %v1169, %v1259
    %v1298 = vmul.f32 %v1170, %v1261
    %v1299 = vmul.f32 %v1171, %v1263
    %v1300 = vmul.f32 %v1172, %v1265
    %v1301 = vmul.f32 %v1173, %v1267
    %v1302 = vmul.f32 %v1174, %v1269
    %v1303 = vmul.f32 %v1175, %v1271
    %v1304 = vadd.f32 %v890, %v1272
    %v1305 = vadd.f32 %v896, %v1273
    %v1306 = vadd.f32 %v902, %v1274
    %v1307 = vadd.f32 %v908, %v1275
    %v1308 = vadd.f32 %v914, %v1276
    %v1309 = vadd.f32 %v920, %v1277
    %v1310 = vadd.f32 %v926, %v1278
    %v1311 = vadd.f32 %v932, %v1279
    %v1312 = vadd.f32 %v938, %v1280
    %v1313 = vadd.f32 %v944, %v1281
    %v1314 = vadd.f32 %v950, %v1282
    %v1315 = vadd.f32 %v956, %v1283
    %v1316 = vadd.f32 %v962, %v1284
    %v1317 = vadd.f32 %v968, %v1285
    %v1318 = vadd.f32 %v974, %v1286
    %v1319 = vadd.f32 %v980, %v1287
    %v1320 = vadd.f32 %v986, %v1288
    %v1321 = vadd.f32 %v992, %v1289
    %v1322 = vadd.f32 %v998, %v1290
    %v1323 = vadd.f32 %v1004, %v1291
    %v1324 = vadd.f32 %v1010, %v1292
    %v1325 = vadd.f32 %v1016, %v1293
    %v1326 = vadd.f32 %v1022, %v1294
    %v1327 = vadd.f32 %v1028, %v1295
    %v1328 = vadd.f32 %v1034, %v1296
    %v1329 = vadd.f32 %v1040, %v1297
    %v1330 = vadd.f32 %v1046, %v1298
    %v1331 = vadd.f32 %v1052, %v1299
    %v1332 = vadd.f32 %v1058, %v1300
    %v1333 = vadd.f32 %v1064, %v1301
    %v1334 = vadd.f32 %v1070, %v1302
    %v1335 = vadd.f32 %v1076, %v1303
    %v1336 = vld [vmem:[#allocation11] sm:$0xff]
    %v1337 = vld [vmem:[#allocation11 + $0x8] sm:$0xff]
    %v1338 = vld [vmem:[#allocation11 + $0x10] sm:$0xff]
    %v1339 = vld [vmem:[#allocation11 + $0x18] sm:$0xff]
    %v1340 = vld [vmem:[#allocation11 + $0x20] sm:$0xff]
    %v1341 = vld [vmem:[#allocation11 + $0x28] sm:$0xff]
    %v1342 = vld [vmem:[#allocation11 + $0x30] sm:$0xff]
    %v1343 = vld [vmem:[#allocation11 + $0x38] sm:$0xff]
    %v1344 = vld [vmem:[#allocation11 + $0x40] sm:$0xff]
    %v1345 = vld [vmem:[#allocation11 + $0x48] sm:$0xff]
    %v1346 = vld [vmem:[#allocation11 + $0x50] sm:$0xff]
    %v1347 = vld [vmem:[#allocation11 + $0x58] sm:$0xff]
    %v1348 = vld [vmem:[#allocation11 + $0x60] sm:$0xff]
    %v1349 = vld [vmem:[#allocation11 + $0x68] sm:$0xff]
    %v1350 = vld [vmem:[#allocation11 + $0x70] sm:$0xff]
    %v1351 = vld [vmem:[#allocation11 + $0x78] sm:$0xff]
    %v1352 = vld [vmem:[%s9] sm:$0x1]
    %v1354 = vlaneseq
    %v1355 = vshrl.u32 %v1354, 7
    %v1356 = vsub.s32 0, %v1355
    %v1357 = vrot.slane %v1352, %v1356
    %1359 = vmatprep.subr.mxu0 0.0
    %1360 = vmatpush1.msra.mxu0 %v1336
    %1361 = vmatprep.subr.mxu0 0.0
    %1362 = vmatpush1.msra.mxu0 %v1337
    %1363 = vmatprep.subr.mxu0 0.0
    %1364 = vmatpush1.msra.mxu0 %v1338
    %1365 = vmatprep.subr.mxu0 0.0
    %1366 = vmatpush1.msra.mxu0 %v1339
    %1367 = vmatprep.subr.mxu0 0.0
    %1368 = vmatpush1.msra.mxu0 %v1340
    %1369 = vmatprep.subr.mxu0 0.0
    %1370 = vmatpush1.msra.mxu0 %v1341
    %1371 = vmatprep.subr.mxu0 0.0
    %1372 = vmatpush1.msra.mxu0 %v1342
    %1373 = vmatprep.subr.mxu0 0.0
    %1374 = vmatpush1.msra.mxu0 %v1343
    %1375 = vmatprep.subr.mxu0 0.0
    %1376 = vmatpush1.msra.mxu0 %v1344
    %1377 = vmatprep.subr.mxu0 0.0
    %1378 = vmatpush1.msra.mxu0 %v1345
    %1379 = vmatprep.subr.mxu0 0.0
    %1380 = vmatpush1.msra.mxu0 %v1346
    %1381 = vmatprep.subr.mxu0 0.0
    %1382 = vmatpush1.msra.mxu0 %v1347
    %1383 = vmatprep.subr.mxu0 0.0
    %1384 = vmatpush1.msra.mxu0 %v1348
    %1385 = vmatprep.subr.mxu0 0.0
    %1386 = vmatpush1.msra.mxu0 %v1349
    %1387 = vmatprep.subr.mxu0 0.0
    %1388 = vmatpush1.msra.mxu0 %v1350
    %1389 = vmatprep.subr.mxu0 0.0
    %1390 = vmatpush1.msra.mxu0 %v1351
    %1391 = vmatprep.subr.mxu0 0.0
    %1392 = vmatpush1.msra.mxu0 0.0
    %1393 = vmatprep.subr.mxu0 0.0
    %1394 = vmatpush1.msra.mxu0 0.0
    %1395 = vmatprep.subr.mxu0 0.0
    %1396 = vmatpush1.msra.mxu0 0.0
    %1397 = vmatprep.subr.mxu0 0.0
    %1398 = vmatpush1.msra.mxu0 0.0
    %1399 = vmatprep.subr.mxu0 0.0
    %1400 = vmatpush1.msra.mxu0 0.0
    %1401 = vmatprep.subr.mxu0 0.0
    %1402 = vmatpush1.msra.mxu0 0.0
    %1403 = vmatprep.subr.mxu0 0.0
    %1404 = vmatpush1.msra.mxu0 0.0
    %1405 = vmatprep.subr.mxu0 0.0
    %1406 = vmatpush1.msra.mxu0 0.0
    %1407 = vmatprep.subr.mxu0 0.0
    %1408 = vmatpush1.msra.mxu0 0.0
    %1409 = vmatprep.subr.mxu0 0.0
    %1410 = vmatpush1.msra.mxu0 0.0
    %1411 = vmatprep.subr.mxu0 0.0
    %1412 = vmatpush1.msra.mxu0 0.0
    %1413 = vmatprep.subr.mxu0 0.0
    %1414 = vmatpush1.msra.mxu0 0.0
    %1415 = vmatprep.subr.mxu0 0.0
    %1416 = vmatpush1.msra.mxu0 0.0
    %1417 = vmatprep.subr.mxu0 0.0
    %1418 = vmatpush1.msra.mxu0 0.0
    %1419 = vmatprep.subr.mxu0 0.0
    %1420 = vmatpush1.msra.mxu0 0.0
    %1421 = vmatprep.subr.mxu0 0.0
    %1422 = vmatpush1.msra.mxu0 0.0
    %1423 = vmatprep.mubr.f32.mxu0 0.0
    %1424 = vmatmul.mubr.f32.gmra.mrb[0].mxu0 %v1304
    %v1425 = vpop.f32.mrb[0].mxu0
    %v1426 = vadd.f32 %v1357, %v1425
    %v1427 = vpop.f32.mrb[0].mxu0
    %1428 = vmatprep.mubr.f32.mxu0 0.0
    %1429 = vmatmul.mubr.f32.gmra.mrb[0].mxu0 %v1305
    %v1430 = vpop.f32.mrb[0].mxu0
    %v1431 = vadd.f32 %v1357, %v1430
    %v1432 = vpop.f32.mrb[0].mxu0
    %1433 = vmatprep.mubr.f32.mxu0 0.0
    %1434 = vmatmul.mubr.f32.gmra.mrb[0].mxu0 %v1306
    %v1435 = vpop.f32.mrb[0].mxu0
    %v1436 = vadd.f32 %v1357, %v1435
    %v1437 = vpop.f32.mrb[0].mxu0
    %1438 = vmatprep.mubr.f32.mxu0 0.0
    %1439 = vmatmul.mubr.f32.gmra.mrb[0].mxu0 %v1307
    %v1440 = vpop.f32.mrb[0].mxu0
    %v1441 = vadd.f32 %v1357, %v1440
    %v1442 = vpop.f32.mrb[0].mxu0
    %1443 = vmatprep.mubr.f32.mxu0 0.0
    %1444 = vmatmul.mubr.f32.gmra.mrb[0].mxu0 %v1308
    %v1445 = vpop.f32.mrb[0].mxu0
    %v1446 = vadd.f32 %v1357, %v1445
    %v1447 = vpop.f32.mrb[0].mxu0
    %1448 = vmatprep.mubr.f32.mxu0 0.0
    %1449 = vmatmul.mubr.f32.gmra.mrb[0].mxu0 %v1309
    %v1450 = vpop.f32.mrb[0].mxu0
    %v1451 = vadd.f32 %v1357, %v1450
    %v1452 = vpop.f32.mrb[0].mxu0
    %1453 = vmatprep.mubr.f32.mxu0 0.0
    %1454 = vmatmul.mubr.f32.gmra.mrb[0].mxu0 %v1310
    %v1455 = vpop.f32.mrb[0].mxu0
    %v1456 = vadd.f32 %v1357, %v1455
    %v1457 = vpop.f32.mrb[0].mxu0
    %1458 = vmatprep.mubr.f32.mxu0 0.0
    %1459 = vmatmul.mubr.f32.gmra.mrb[0].mxu0 %v1311
    %v1460 = vpop.f32.mrb[0].mxu0
    %v1461 = vadd.f32 %v1357, %v1460
    %v1462 = vpop.f32.mrb[0].mxu0
    %1463 = vmatprep.mubr.f32.mxu0 0.0
    %1464 = vmatmul.mubr.f32.gmra.mrb[0].mxu0 %v1312
    %v1465 = vpop.f32.mrb[0].mxu0
    %v1466 = vadd.f32 %v1357, %v1465
    %v1467 = vpop.f32.mrb[0].mxu0
    %1468 = vmatprep.mubr.f32.mxu0 0.0
    %1469 = vmatmul.mubr.f32.gmra.mrb[0].mxu0 %v1313
    %v1470 = vpop.f32.mrb[0].mxu0
    %v1471 = vadd.f32 %v1357, %v1470
    %v1472 = vpop.f32.mrb[0].mxu0
    %1473 = vmatprep.mubr.f32.mxu0 0.0
    %1474 = vmatmul.mubr.f32.gmra.mrb[0].mxu0 %v1314
    %v1475 = vpop.f32.mrb[0].mxu0
    %v1476 = vadd.f32 %v1357, %v1475
    %v1477 = vpop.f32.mrb[0].mxu0
    %1478 = vmatprep.mubr.f32.mxu0 0.0
    %1479 = vmatmul.mubr.f32.gmra.mrb[0].mxu0 %v1315
    %v1480 = vpop.f32.mrb[0].mxu0
    %v1481 = vadd.f32 %v1357, %v1480
    %v1482 = vpop.f32.mrb[0].mxu0
    %1483 = vmatprep.mubr.f32.mxu0 0.0
    %1484 = vmatmul.mubr.f32.gmra.mrb[0].mxu0 %v1316
    %v1485 = vpop.f32.mrb[0].mxu0
    %v1486 = vadd.f32 %v1357, %v1485
    %v1487 = vpop.f32.mrb[0].mxu0
    %1488 = vmatprep.mubr.f32.mxu0 0.0
    %1489 = vmatmul.mubr.f32.gmra.mrb[0].mxu0 %v1317
    %v1490 = vpop.f32.mrb[0].mxu0
    %v1491 = vadd.f32 %v1357, %v1490
    %v1492 = vpop.f32.mrb[0].mxu0
    %1493 = vmatprep.mubr.f32.mxu0 0.0
    %1494 = vmatmul.mubr.f32.gmra.mrb[0].mxu0 %v1318
    %v1495 = vpop.f32.mrb[0].mxu0
    %v1496 = vadd.f32 %v1357, %v1495
    %v1497 = vpop.f32.mrb[0].mxu0
    %1498 = vmatprep.mubr.f32.mxu0 0.0
    %1499 = vmatmul.mubr.f32.gmra.mrb[0].mxu0 %v1319
    %v1500 = vpop.f32.mrb[0].mxu0
    %v1501 = vadd.f32 %v1357, %v1500
    %v1502 = vpop.f32.mrb[0].mxu0
    %1503 = vmatprep.mubr.f32.mxu0 0.0
    %1504 = vmatmul.mubr.f32.gmra.mrb[0].mxu0 %v1320
    %v1505 = vpop.f32.mrb[0].mxu0
    %v1506 = vadd.f32 %v1357, %v1505
    %v1507 = vpop.f32.mrb[0].mxu0
    %1508 = vmatprep.mubr.f32.mxu0 0.0
    %1509 = vmatmul.mubr.f32.gmra.mrb[0].mxu0 %v1321
    %v1510 = vpop.f32.mrb[0].mxu0
    %v1511 = vadd.f32 %v1357, %v1510
    %v1512 = vpop.f32.mrb[0].mxu0
    %1513 = vmatprep.mubr.f32.mxu0 0.0
    %1514 = vmatmul.mubr.f32.gmra.mrb[0].mxu0 %v1322
    %v1515 = vpop.f32.mrb[0].mxu0
    %v1516 = vadd.f32 %v1357, %v1515
    %v1517 = vpop.f32.mrb[0].mxu0
    %1518 = vmatprep.mubr.f32.mxu0 0.0
    %1519 = vmatmul.mubr.f32.gmra.mrb[0].mxu0 %v1323
    %v1520 = vpop.f32.mrb[0].mxu0
    %v1521 = vadd.f32 %v1357, %v1520
    %v1522 = vpop.f32.mrb[0].mxu0
    %1523 = vmatprep.mubr.f32.mxu0 0.0
    %1524 = vmatmul.mubr.f32.gmra.mrb[0].mxu0 %v1324
    %v1525 = vpop.f32.mrb[0].mxu0
    %v1526 = vadd.f32 %v1357, %v1525
    %v1527 = vpop.f32.mrb[0].mxu0
    %1528 = vmatprep.mubr.f32.mxu0 0.0
    %1529 = vmatmul.mubr.f32.gmra.mrb[0].mxu0 %v1325
    %v1530 = vpop.f32.mrb[0].mxu0
    %v1531 = vadd.f32 %v1357, %v1530
    %v1532 = vpop.f32.mrb[0].mxu0
    %1533 = vmatprep.mubr.f32.mxu0 0.0
    %1534 = vmatmul.mubr.f32.gmra.mrb[0].mxu0 %v1326
    %v1535 = vpop.f32.mrb[0].mxu0
    %v1536 = vadd.f32 %v1357, %v1535
    %v1537 = vpop.f32.mrb[0].mxu0
    %1538 = vmatprep.mubr.f32.mxu0 0.0
    %1539 = vmatmul.mubr.f32.gmra.mrb[0].mxu0 %v1327
    %v1540 = vpop.f32.mrb[0].mxu0
    %v1541 = vadd.f32 %v1357, %v1540
    %v1542 = vpop.f32.mrb[0].mxu0
    %1543 = vmatprep.mubr.f32.mxu0 0.0
    %1544 = vmatmul.mubr.f32.gmra.mrb[0].mxu0 %v1328
    %v1545 = vpop.f32.mrb[0].mxu0
    %v1546 = vadd.f32 %v1357, %v1545
    %v1547 = vpop.f32.mrb[0].mxu0
    %1548 = vmatprep.mubr.f32.mxu0 0.0
    %1549 = vmatmul.mubr.f32.gmra.mrb[0].mxu0 %v1329
    %v1550 = vpop.f32.mrb[0].mxu0
    %v1551 = vadd.f32 %v1357, %v1550
    %v1552 = vpop.f32.mrb[0].mxu0
    %1553 = vmatprep.mubr.f32.mxu0 0.0
    %1554 = vmatmul.mubr.f32.gmra.mrb[0].mxu0 %v1330
    %v1555 = vpop.f32.mrb[0].mxu0
    %v1556 = vadd.f32 %v1357, %v1555
    %v1557 = vpop.f32.mrb[0].mxu0
    %1558 = vmatprep.mubr.f32.mxu0 0.0
    %1559 = vmatmul.mubr.f32.gmra.mrb[0].mxu0 %v1331
    %v1560 = vpop.f32.mrb[0].mxu0
    %v1561 = vadd.f32 %v1357, %v1560
    %v1562 = vpop.f32.mrb[0].mxu0
    %1563 = vmatprep.mubr.f32.mxu0 0.0
    %1564 = vmatmul.mubr.f32.gmra.mrb[0].mxu0 %v1332
    %v1565 = vpop.f32.mrb[0].mxu0
    %v1566 = vadd.f32 %v1357, %v1565
    %v1567 = vpop.f32.mrb[0].mxu0
    %1568 = vmatprep.mubr.f32.mxu0 0.0
    %1569 = vmatmul.mubr.f32.gmra.mrb[0].mxu0 %v1333
    %v1570 = vpop.f32.mrb[0].mxu0
    %v1571 = vadd.f32 %v1357, %v1570
    %v1572 = vpop.f32.mrb[0].mxu0
    %1573 = vmatprep.mubr.f32.mxu0 0.0
    %1574 = vmatmul.mubr.f32.gmra.mrb[0].mxu0 %v1334
    %v1575 = vpop.f32.mrb[0].mxu0
    %v1576 = vadd.f32 %v1357, %v1575
    %v1577 = vpop.f32.mrb[0].mxu0
    %1578 = vmatprep.mubr.f32.mxu0 0.0
    %1579 = vmatmul.mubr.f32.gmra.mrb[0].mxu0 %v1335
    %v1580 = vpop.f32.mrb[0].mxu0
    %v1581 = vadd.f32 %v1357, %v1580
    %v1582 = vpop.f32.mrb[0].mxu0
    %1583 = vdwg.mxu0
    %v1584 = vmax.f32 %v1426, 0.0
    %v1585 = vmax.f32 %v1431, 0.0
    %v1586 = vmax.f32 %v1436, 0.0
    %v1587 = vmax.f32 %v1441, 0.0
    %v1588 = vmax.f32 %v1446, 0.0
    %v1589 = vmax.f32 %v1451, 0.0
    %v1590 = vmax.f32 %v1456, 0.0
    %v1591 = vmax.f32 %v1461, 0.0
    %v1592 = vmax.f32 %v1466, 0.0
    %v1593 = vmax.f32 %v1471, 0.0
    %v1594 = vmax.f32 %v1476, 0.0
    %v1595 = vmax.f32 %v1481, 0.0
    %v1596 = vmax.f32 %v1486, 0.0
    %v1597 = vmax.f32 %v1491, 0.0
    %v1598 = vmax.f32 %v1496, 0.0
    %v1599 = vmax.f32 %v1501, 0.0
    %v1600 = vmax.f32 %v1506, 0.0
    %v1601 = vmax.f32 %v1511, 0.0
    %v1602 = vmax.f32 %v1516, 0.0
    %v1603 = vmax.f32 %v1521, 0.0
    %v1604 = vmax.f32 %v1526, 0.0
    %v1605 = vmax.f32 %v1531, 0.0
    %v1606 = vmax.f32 %v1536, 0.0
    %v1607 = vmax.f32 %v1541, 0.0
    %v1608 = vmax.f32 %v1546, 0.0
    %v1609 = vmax.f32 %v1551, 0.0
    %v1610 = vmax.f32 %v1556, 0.0
    %v1611 = vmax.f32 %v1561, 0.0
    %v1612 = vmax.f32 %v1566, 0.0
    %v1613 = vmax.f32 %v1571, 0.0
    %v1614 = vmax.f32 %v1576, 0.0
    %v1615 = vmax.f32 %v1581, 0.0
    %v1616 = vld [vmem:[#allocation13] sm:$0xff]
    %v1617 = vld [vmem:[#allocation13 + $0x8] sm:$0xff]
    %v1618 = vld [vmem:[#allocation13 + $0x10] sm:$0xff]
    %v1619 = vld [vmem:[#allocation13 + $0x18] sm:$0xff]
    %v1620 = vld [vmem:[#allocation13 + $0x20] sm:$0xff]
    %v1621 = vld [vmem:[#allocation13 + $0x28] sm:$0xff]
    %v1622 = vld [vmem:[#allocation13 + $0x30] sm:$0xff]
    %v1623 = vld [vmem:[#allocation13 + $0x38] sm:$0xff]
    %v1624 = vld [vmem:[#allocation13 + $0x40] sm:$0xff]
    %v1625 = vld [vmem:[#allocation13 + $0x48] sm:$0xff]
    %v1626 = vld [vmem:[#allocation13 + $0x50] sm:$0xff]
    %v1627 = vld [vmem:[#allocation13 + $0x58] sm:$0xff]
    %v1628 = vld [vmem:[#allocation13 + $0x60] sm:$0xff]
    %v1629 = vld [vmem:[#allocation13 + $0x68] sm:$0xff]
    %v1630 = vld [vmem:[#allocation13 + $0x70] sm:$0xff]
    %v1631 = vld [vmem:[#allocation13 + $0x78] sm:$0xff]
    %v1632 = vld [vmem:[#allocation13 + $0x80] sm:$0xff]
    %v1633 = vld [vmem:[#allocation13 + $0x88] sm:$0xff]
    %v1634 = vld [vmem:[#allocation13 + $0x90] sm:$0xff]
    %v1635 = vld [vmem:[#allocation13 + $0x98] sm:$0xff]
    %v1636 = vld [vmem:[#allocation13 + $0xa0] sm:$0xff]
    %v1637 = vld [vmem:[#allocation13 + $0xa8] sm:$0xff]
    %v1638 = vld [vmem:[#allocation13 + $0xb0] sm:$0xff]
    %v1639 = vld [vmem:[#allocation13 + $0xb8] sm:$0xff]
    %v1640 = vld [vmem:[#allocation13 + $0xc0] sm:$0xff]
    %v1641 = vld [vmem:[#allocation13 + $0xc8] sm:$0xff]
    %v1642 = vld [vmem:[#allocation13 + $0xd0] sm:$0xff]
    %v1643 = vld [vmem:[#allocation13 + $0xd8] sm:$0xff]
    %v1644 = vld [vmem:[#allocation13 + $0xe0] sm:$0xff]
    %v1645 = vld [vmem:[#allocation13 + $0xe8] sm:$0xff]
    %v1646 = vld [vmem:[#allocation13 + $0xf0] sm:$0xff]
    %v1647 = vld [vmem:[#allocation13 + $0xf8] sm:$0xff]
    %v1648 = vld [vmem:[%s11] sm:$0x3]
    %v1650 = vlaneseq
    %v1651 = vshrl.u32 %v1650, 7
    %v1652 = vsub.s32 0, %v1651
    %v1653 = vrot.slane %v1648, %v1652
    %v1654 = vlaneseq
    %v1655 = vshrl.u32 %v1654, 7
    %v1656 = vsub.s32 1, %v1655
    %v1657 = vrot.slane %v1648, %v1656
    %1660 = vmatprep.subr.mxu0 %v1617
    %1661 = vmatpush1.msra.mxu0 %v1616
    %1662 = vmatprep.subr.mxu0 %v1619
    %1663 = vmatpush1.msra.mxu0 %v1618
    %1664 = vmatprep.subr.mxu0 %v1621
    %1665 = vmatpush1.msra.mxu0 %v1620
    %1666 = vmatprep.subr.mxu0 %v1623
    %1667 = vmatpush1.msra.mxu0 %v1622
    %1668 = vmatprep.subr.mxu0 %v1625
    %1669 = vmatpush1.msra.mxu0 %v1624
    %1670 = vmatprep.subr.mxu0 %v1627
    %1671 = vmatpush1.msra.mxu0 %v1626
    %1672 = vmatprep.subr.mxu0 %v1629
    %1673 = vmatpush1.msra.mxu0 %v1628
    %1674 = vmatprep.subr.mxu0 %v1631
    %1675 = vmatpush1.msra.mxu0 %v1630
    %1676 = vmatprep.subr.mxu0 %v1633
    %1677 = vmatpush1.msra.mxu0 %v1632
    %1678 = vmatprep.subr.mxu0 %v1635
    %1679 = vmatpush1.msra.mxu0 %v1634
    %1680 = vmatprep.subr.mxu0 %v1637
    %1681 = vmatpush1.msra.mxu0 %v1636
    %1682 = vmatprep.subr.mxu0 %v1639
    %1683 = vmatpush1.msra.mxu0 %v1638
    %1684 = vmatprep.subr.mxu0 %v1641
    %1685 = vmatpush1.msra.mxu0 %v1640
    %1686 = vmatprep.subr.mxu0 %v1643
    %1687 = vmatpush1.msra.mxu0 %v1642
    %1688 = vmatprep.subr.mxu0 %v1645
    %1689 = vmatpush1.msra.mxu0 %v1644
    %1690 = vmatprep.subr.mxu0 %v1647
    %1691 = vmatpush1.msra.mxu0 %v1646
    %1692 = vmatprep.subr.mxu0 0.0
    %1693 = vmatpush1.msra.mxu0 0.0
    %1694 = vmatprep.subr.mxu0 0.0
    %1695 = vmatpush1.msra.mxu0 0.0
    %1696 = vmatprep.subr.mxu0 0.0
    %1697 = vmatpush1.msra.mxu0 0.0
    %1698 = vmatprep.subr.mxu0 0.0
    %1699 = vmatpush1.msra.mxu0 0.0
    %1700 = vmatprep.subr.mxu0 0.0
    %1701 = vmatpush1.msra.mxu0 0.0
    %1702 = vmatprep.subr.mxu0 0.0
    %1703 = vmatpush1.msra.mxu0 0.0
    %1704 = vmatprep.subr.mxu0 0.0
    %1705 = vmatpush1.msra.mxu0 0.0
    %1706 = vmatprep.subr.mxu0 0.0
    %1707 = vmatpush1.msra.mxu0 0.0
    %1708 = vmatprep.subr.mxu0 0.0
    %1709 = vmatpush1.msra.mxu0 0.0
    %1710 = vmatprep.subr.mxu0 0.0
    %1711 = vmatpush1.msra.mxu0 0.0
    %1712 = vmatprep.subr.mxu0 0.0
    %1713 = vmatpush1.msra.mxu0 0.0
    %1714 = vmatprep.subr.mxu0 0.0
    %1715 = vmatpush1.msra.mxu0 0.0
    %1716 = vmatprep.subr.mxu0 0.0
    %1717 = vmatpush1.msra.mxu0 0.0
    %1718 = vmatprep.subr.mxu0 0.0
    %1719 = vmatpush1.msra.mxu0 0.0
    %1720 = vmatprep.subr.mxu0 0.0
    %1721 = vmatpush1.msra.mxu0 0.0
    %1722 = vmatprep.subr.mxu0 0.0
    %1723 = vmatpush1.msra.mxu0 0.0
    %1724 = vmatprep.mubr.f32.mxu0 0.0
    %1725 = vmatmul.mubr.f32.gmra.mrb[0].mxu0 %v1584
    %v1726 = vpop.f32.mrb[0].mxu0
    %v1727 = vadd.f32 %v1653, %v1726
    %v1728 = vpop.f32.mrb[0].mxu0
    %v1729 = vadd.f32 %v1657, %v1728
    %1730 = vmatprep.mubr.f32.mxu0 0.0
    %1731 = vmatmul.mubr.f32.gmra.mrb[0].mxu0 %v1585
    %v1732 = vpop.f32.mrb[0].mxu0
    %v1733 = vadd.f32 %v1653, %v1732
    %v1734 = vpop.f32.mrb[0].mxu0
    %v1735 = vadd.f32 %v1657, %v1734
    %1736 = vmatprep.mubr.f32.mxu0 0.0
    %1737 = vmatmul.mubr.f32.gmra.mrb[0].mxu0 %v1586
    %v1738 = vpop.f32.mrb[0].mxu0
    %v1739 = vadd.f32 %v1653, %v1738
    %v1740 = vpop.f32.mrb[0].mxu0
    %v1741 = vadd.f32 %v1657, %v1740
    %1742 = vmatprep.mubr.f32.mxu0 0.0
    %1743 = vmatmul.mubr.f32.gmra.mrb[0].mxu0 %v1587
    %v1744 = vpop.f32.mrb[0].mxu0
    %v1745 = vadd.f32 %v1653, %v1744
    %v1746 = vpop.f32.mrb[0].mxu0
    %v1747 = vadd.f32 %v1657, %v1746
    %1748 = vmatprep.mubr.f32.mxu0 0.0
    %1749 = vmatmul.mubr.f32.gmra.mrb[0].mxu0 %v1588
    %v1750 = vpop.f32.mrb[0].mxu0
    %v1751 = vadd.f32 %v1653, %v1750
    %v1752 = vpop.f32.mrb[0].mxu0
    %v1753 = vadd.f32 %v1657, %v1752
    %1754 = vmatprep.mubr.f32.mxu0 0.0
    %1755 = vmatmul.mubr.f32.gmra.mrb[0].mxu0 %v1589
    %v1756 = vpop.f32.mrb[0].mxu0
    %v1757 = vadd.f32 %v1653, %v1756
    %v1758 = vpop.f32.mrb[0].mxu0
    %v1759 = vadd.f32 %v1657, %v1758
    %1760 = vmatprep.mubr.f32.mxu0 0.0
    %1761 = vmatmul.mubr.f32.gmra.mrb[0].mxu0 %v1590
    %v1762 = vpop.f32.mrb[0].mxu0
    %v1763 = vadd.f32 %v1653, %v1762
    %v1764 = vpop.f32.mrb[0].mxu0
    %v1765 = vadd.f32 %v1657, %v1764
    %1766 = vmatprep.mubr.f32.mxu0 0.0
    %1767 = vmatmul.mubr.f32.gmra.mrb[0].mxu0 %v1591
    %v1768 = vpop.f32.mrb[0].mxu0
    %v1769 = vadd.f32 %v1653, %v1768
    %v1770 = vpop.f32.mrb[0].mxu0
    %v1771 = vadd.f32 %v1657, %v1770
    %1772 = vmatprep.mubr.f32.mxu0 0.0
    %1773 = vmatmul.mubr.f32.gmra.mrb[0].mxu0 %v1592
    %v1774 = vpop.f32.mrb[0].mxu0
    %v1775 = vadd.f32 %v1653, %v1774
    %v1776 = vpop.f32.mrb[0].mxu0
    %v1777 = vadd.f32 %v1657, %v1776
    %1778 = vmatprep.mubr.f32.mxu0 0.0
    %1779 = vmatmul.mubr.f32.gmra.mrb[0].mxu0 %v1593
    %v1780 = vpop.f32.mrb[0].mxu0
    %v1781 = vadd.f32 %v1653, %v1780
    %v1782 = vpop.f32.mrb[0].mxu0
    %v1783 = vadd.f32 %v1657, %v1782
    %1784 = vmatprep.mubr.f32.mxu0 0.0
    %1785 = vmatmul.mubr.f32.gmra.mrb[0].mxu0 %v1594
    %v1786 = vpop.f32.mrb[0].mxu0
    %v1787 = vadd.f32 %v1653, %v1786
    %v1788 = vpop.f32.mrb[0].mxu0
    %v1789 = vadd.f32 %v1657, %v1788
    %1790 = vmatprep.mubr.f32.mxu0 0.0
    %1791 = vmatmul.mubr.f32.gmra.mrb[0].mxu0 %v1595
    %v1792 = vpop.f32.mrb[0].mxu0
    %v1793 = vadd.f32 %v1653, %v1792
    %v1794 = vpop.f32.mrb[0].mxu0
    %v1795 = vadd.f32 %v1657, %v1794
    %1796 = vmatprep.mubr.f32.mxu0 0.0
    %1797 = vmatmul.mubr.f32.gmra.mrb[0].mxu0 %v1596
    %v1798 = vpop.f32.mrb[0].mxu0
    %v1799 = vadd.f32 %v1653, %v1798
    %v1800 = vpop.f32.mrb[0].mxu0
    %v1801 = vadd.f32 %v1657, %v1800
    %1802 = vmatprep.mubr.f32.mxu0 0.0
    %1803 = vmatmul.mubr.f32.gmra.mrb[0].mxu0 %v1597
    %v1804 = vpop.f32.mrb[0].mxu0
    %v1805 = vadd.f32 %v1653, %v1804
    %v1806 = vpop.f32.mrb[0].mxu0
    %v1807 = vadd.f32 %v1657, %v1806
    %1808 = vmatprep.mubr.f32.mxu0 0.0
    %1809 = vmatmul.mubr.f32.gmra.mrb[0].mxu0 %v1598
    %v1810 = vpop.f32.mrb[0].mxu0
    %v1811 = vadd.f32 %v1653, %v1810
    %v1812 = vpop.f32.mrb[0].mxu0
    %v1813 = vadd.f32 %v1657, %v1812
    %1814 = vmatprep.mubr.f32.mxu0 0.0
    %1815 = vmatmul.mubr.f32.gmra.mrb[0].mxu0 %v1599
    %v1816 = vpop.f32.mrb[0].mxu0
    %v1817 = vadd.f32 %v1653, %v1816
    %v1818 = vpop.f32.mrb[0].mxu0
    %v1819 = vadd.f32 %v1657, %v1818
    %1820 = vmatprep.mubr.f32.mxu0 0.0
    %1821 = vmatmul.mubr.f32.gmra.mrb[0].mxu0 %v1600
    %v1822 = vpop.f32.mrb[0].mxu0
    %v1823 = vadd.f32 %v1653, %v1822
    %v1824 = vpop.f32.mrb[0].mxu0
    %v1825 = vadd.f32 %v1657, %v1824
    %1826 = vmatprep.mubr.f32.mxu0 0.0
    %1827 = vmatmul.mubr.f32.gmra.mrb[0].mxu0 %v1601
    %v1828 = vpop.f32.mrb[0].mxu0
    %v1829 = vadd.f32 %v1653, %v1828
    %v1830 = vpop.f32.mrb[0].mxu0
    %v1831 = vadd.f32 %v1657, %v1830
    %1832 = vmatprep.mubr.f32.mxu0 0.0
    %1833 = vmatmul.mubr.f32.gmra.mrb[0].mxu0 %v1602
    %v1834 = vpop.f32.mrb[0].mxu0
    %v1835 = vadd.f32 %v1653, %v1834
    %v1836 = vpop.f32.mrb[0].mxu0
    %v1837 = vadd.f32 %v1657, %v1836
    %1838 = vmatprep.mubr.f32.mxu0 0.0
    %1839 = vmatmul.mubr.f32.gmra.mrb[0].mxu0 %v1603
    %v1840 = vpop.f32.mrb[0].mxu0
    %v1841 = vadd.f32 %v1653, %v1840
    %v1842 = vpop.f32.mrb[0].mxu0
    %v1843 = vadd.f32 %v1657, %v1842
    %1844 = vmatprep.mubr.f32.mxu0 0.0
    %1845 = vmatmul.mubr.f32.gmra.mrb[0].mxu0 %v1604
    %v1846 = vpop.f32.mrb[0].mxu0
    %v1847 = vadd.f32 %v1653, %v1846
    %v1848 = vpop.f32.mrb[0].mxu0
    %v1849 = vadd.f32 %v1657, %v1848
    %1850 = vmatprep.mubr.f32.mxu0 0.0
    %1851 = vmatmul.mubr.f32.gmra.mrb[0].mxu0 %v1605
    %v1852 = vpop.f32.mrb[0].mxu0
    %v1853 = vadd.f32 %v1653, %v1852
    %v1854 = vpop.f32.mrb[0].mxu0
    %v1855 = vadd.f32 %v1657, %v1854
    %1856 = vmatprep.mubr.f32.mxu0 0.0
    %1857 = vmatmul.mubr.f32.gmra.mrb[0].mxu0 %v1606
    %v1858 = vpop.f32.mrb[0].mxu0
    %v1859 = vadd.f32 %v1653, %v1858
    %v1860 = vpop.f32.mrb[0].mxu0
    %v1861 = vadd.f32 %v1657, %v1860
    %1862 = vmatprep.mubr.f32.mxu0 0.0
    %1863 = vmatmul.mubr.f32.gmra.mrb[0].mxu0 %v1607
    %v1864 = vpop.f32.mrb[0].mxu0
    %v1865 = vadd.f32 %v1653, %v1864
    %v1866 = vpop.f32.mrb[0].mxu0
    %v1867 = vadd.f32 %v1657, %v1866
    %1868 = vmatprep.mubr.f32.mxu0 0.0
    %1869 = vmatmul.mubr.f32.gmra.mrb[0].mxu0 %v1608
    %v1870 = vpop.f32.mrb[0].mxu0
    %v1871 = vadd.f32 %v1653, %v1870
    %v1872 = vpop.f32.mrb[0].mxu0
    %v1873 = vadd.f32 %v1657, %v1872
    %1874 = vmatprep.mubr.f32.mxu0 0.0
    %1875 = vmatmul.mubr.f32.gmra.mrb[0].mxu0 %v1609
    %v1876 = vpop.f32.mrb[0].mxu0
    %v1877 = vadd.f32 %v1653, %v1876
    %v1878 = vpop.f32.mrb[0].mxu0
    %v1879 = vadd.f32 %v1657, %v1878
    %1880 = vmatprep.mubr.f32.mxu0 0.0
    %1881 = vmatmul.mubr.f32.gmra.mrb[0].mxu0 %v1610
    %v1882 = vpop.f32.mrb[0].mxu0
    %v1883 = vadd.f32 %v1653, %v1882
    %v1884 = vpop.f32.mrb[0].mxu0
    %v1885 = vadd.f32 %v1657, %v1884
    %1886 = vmatprep.mubr.f32.mxu0 0.0
    %1887 = vmatmul.mubr.f32.gmra.mrb[0].mxu0 %v1611
    %v1888 = vpop.f32.mrb[0].mxu0
    %v1889 = vadd.f32 %v1653, %v1888
    %v1890 = vpop.f32.mrb[0].mxu0
    %v1891 = vadd.f32 %v1657, %v1890
    %1892 = vmatprep.mubr.f32.mxu0 0.0
    %1893 = vmatmul.mubr.f32.gmra.mrb[0].mxu0 %v1612
    %v1894 = vpop.f32.mrb[0].mxu0
    %v1895 = vadd.f32 %v1653, %v1894
    %v1896 = vpop.f32.mrb[0].mxu0
    %v1897 = vadd.f32 %v1657, %v1896
    %1898 = vmatprep.mubr.f32.mxu0 0.0
    %1899 = vmatmul.mubr.f32.gmra.mrb[0].mxu0 %v1613
    %v1900 = vpop.f32.mrb[0].mxu0
    %v1901 = vadd.f32 %v1653, %v1900
    %v1902 = vpop.f32.mrb[0].mxu0
    %v1903 = vadd.f32 %v1657, %v1902
    %1904 = vmatprep.mubr.f32.mxu0 0.0
    %1905 = vmatmul.mubr.f32.gmra.mrb[0].mxu0 %v1614
    %v1906 = vpop.f32.mrb[0].mxu0
    %v1907 = vadd.f32 %v1653, %v1906
    %v1908 = vpop.f32.mrb[0].mxu0
    %v1909 = vadd.f32 %v1657, %v1908
    %1910 = vmatprep.mubr.f32.mxu0 0.0
    %1911 = vmatmul.mubr.f32.gmra.mrb[0].mxu0 %v1615
    %v1912 = vpop.f32.mrb[0].mxu0
    %v1913 = vadd.f32 %v1653, %v1912
    %v1914 = vpop.f32.mrb[0].mxu0
    %v1915 = vadd.f32 %v1657, %v1914
    %1916 = vdwg.mxu0
    %1917 = vst [vmem:[#allocation14] sm:$0xff] %v1727
    %1918 = vst [vmem:[#allocation14 + $0x8] sm:$0xff] %v1729
    %1919 = vst [vmem:[#allocation14 + $0x10] sm:$0xff] %v1733
    %1920 = vst [vmem:[#allocation14 + $0x18] sm:$0xff] %v1735
    %1921 = vst [vmem:[#allocation14 + $0x20] sm:$0xff] %v1739
    %1922 = vst [vmem:[#allocation14 + $0x28] sm:$0xff] %v1741
    %1923 = vst [vmem:[#allocation14 + $0x30] sm:$0xff] %v1745
    %1924 = vst [vmem:[#allocation14 + $0x38] sm:$0xff] %v1747
    %1925 = vst [vmem:[#allocation14 + $0x40] sm:$0xff] %v1751
    %1926 = vst [vmem:[#allocation14 + $0x48] sm:$0xff] %v1753
    %1927 = vst [vmem:[#allocation14 + $0x50] sm:$0xff] %v1757
    %1928 = vst [vmem:[#allocation14 + $0x58] sm:$0xff] %v1759
    %1929 = vst [vmem:[#allocation14 + $0x60] sm:$0xff] %v1763
    %1930 = vst [vmem:[#allocation14 + $0x68] sm:$0xff] %v1765
    %1931 = vst [vmem:[#allocation14 + $0x70] sm:$0xff] %v1769
    %1932 = vst [vmem:[#allocation14 + $0x78] sm:$0xff] %v1771
    %1933 = vst [vmem:[#allocation14 + $0x80] sm:$0xff] %v1775
    %1934 = vst [vmem:[#allocation14 + $0x88] sm:$0xff] %v1777
    %1935 = vst [vmem:[#allocation14 + $0x90] sm:$0xff] %v1781
    %1936 = vst [vmem:[#allocation14 + $0x98] sm:$0xff] %v1783
    %1937 = vst [vmem:[#allocation14 + $0xa0] sm:$0xff] %v1787
    %1938 = vst [vmem:[#allocation14 + $0xa8] sm:$0xff] %v1789
    %1939 = vst [vmem:[#allocation14 + $0xb0] sm:$0xff] %v1793
    %1940 = vst [vmem:[#allocation14 + $0xb8] sm:$0xff] %v1795
    %1941 = vst [vmem:[#allocation14 + $0xc0] sm:$0xff] %v1799
    %1942 = vst [vmem:[#allocation14 + $0xc8] sm:$0xff] %v1801
    %1943 = vst [vmem:[#allocation14 + $0xd0] sm:$0xff] %v1805
    %1944 = vst [vmem:[#allocation14 + $0xd8] sm:$0xff] %v1807
    %1945 = vst [vmem:[#allocation14 + $0xe0] sm:$0xff] %v1811
    %1946 = vst [vmem:[#allocation14 + $0xe8] sm:$0xff] %v1813
    %1947 = vst [vmem:[#allocation14 + $0xf0] sm:$0xff] %v1817
    %1948 = vst [vmem:[#allocation14 + $0xf8] sm:$0xff] %v1819
    %1949 = vst [vmem:[#allocation14 + $0x100] sm:$0xff] %v1823
    %1950 = vst [vmem:[#allocation14 + $0x108] sm:$0xff] %v1825
    %1951 = vst [vmem:[#allocation14 + $0x110] sm:$0xff] %v1829
    %1952 = vst [vmem:[#allocation14 + $0x118] sm:$0xff] %v1831
    %1953 = vst [vmem:[#allocation14 + $0x120] sm:$0xff] %v1835
    %1954 = vst [vmem:[#allocation14 + $0x128] sm:$0xff] %v1837
    %1955 = vst [vmem:[#allocation14 + $0x130] sm:$0xff] %v1841
    %1956 = vst [vmem:[#allocation14 + $0x138] sm:$0xff] %v1843
    %1957 = vst [vmem:[#allocation14 + $0x140] sm:$0xff] %v1847
    %1958 = vst [vmem:[#allocation14 + $0x148] sm:$0xff] %v1849
    %1959 = vst [vmem:[#allocation14 + $0x150] sm:$0xff] %v1853
    %1960 = vst [vmem:[#allocation14 + $0x158] sm:$0xff] %v1855
    %1961 = vst [vmem:[#allocation14 + $0x160] sm:$0xff] %v1859
    %1962 = vst [vmem:[#allocation14 + $0x168] sm:$0xff] %v1861
    %1963 = vst [vmem:[#allocation14 + $0x170] sm:$0xff] %v1865
    %1964 = vst [vmem:[#allocation14 + $0x178] sm:$0xff] %v1867
    %1965 = vst [vmem:[#allocation14 + $0x180] sm:$0xff] %v1871
    %1966 = vst [vmem:[#allocation14 + $0x188] sm:$0xff] %v1873
    %1967 = vst [vmem:[#allocation14 + $0x190] sm:$0xff] %v1877
    %1968 = vst [vmem:[#allocation14 + $0x198] sm:$0xff] %v1879
    %1969 = vst [vmem:[#allocation14 + $0x1a0] sm:$0xff] %v1883
    %1970 = vst [vmem:[#allocation14 + $0x1a8] sm:$0xff] %v1885
    %1971 = vst [vmem:[#allocation14 + $0x1b0] sm:$0xff] %v1889
    %1972 = vst [vmem:[#allocation14 + $0x1b8] sm:$0xff] %v1891
    %1973 = vst [vmem:[#allocation14 + $0x1c0] sm:$0xff] %v1895
    %1974 = vst [vmem:[#allocation14 + $0x1c8] sm:$0xff] %v1897
    %1975 = vst [vmem:[#allocation14 + $0x1d0] sm:$0xff] %v1901
    %1976 = vst [vmem:[#allocation14 + $0x1d8] sm:$0xff] %v1903
    %1977 = vst [vmem:[#allocation14 + $0x1e0] sm:$0xff] %v1907
    %1978 = vst [vmem:[#allocation14 + $0x1e8] sm:$0xff] %v1909
    %1979 = vst [vmem:[#allocation14 + $0x1f0] sm:$0xff] %v1913
    %1980 = vst [vmem:[#allocation14 + $0x1f8] sm:$0xff] %v1915
    // Predicated region
    $region78: #{vae_forward_pallas.1} parent=1 // pred_check
      _
    $region79: #{vae_forward_pallas.1} parent=1 // pred_check_branch
      %1982 = sbr.rel (0) target = $region81
    $region80: #{vae_forward_pallas.1} parent=1 // pred_region
      %s1984 = ssub.s32 8192, 8192
      %1985 = vsyncadd [#allocation4], %s1984
      %s1986 = sshll.u32 [#allocation14], 4
      %s1987 = int_to_ptr.vmem [resolvable:$true] %s1986
      %1992 = dma.vmem_to_hbm [thread:$0]  %s1987, 8192, %s12, [#allocation4], 256, 256, 16
    $region81: #{vae_forward_pallas.1} parent=1 // pred_fallthru
      _
    // Predicated region
    $region82: #{vae_forward_pallas.1} parent=1 // pred_check
      _
    $region83: #{vae_forward_pallas.1} parent=1 // pred_check_branch
      %1994 = sbr.rel (0) target = $region85
    $region84: #{vae_forward_pallas.1} parent=1 // pred_region
      _
    $region85: #{vae_forward_pallas.1} parent=1 // pred_fallthru
      _
    // Predicated region
    $region86: #{vae_forward_pallas.1} parent=1 // pred_check
      _
    $region87: #{vae_forward_pallas.1} parent=1 // pred_check_branch
      %1996 = sbr.rel (0) target = $region89
    $region88: #{vae_forward_pallas.1} parent=1 // pred_region
      %1997 = dma.done [#allocation4], 8192
    $region89: #{vae_forward_pallas.1} parent=1 // pred_fallthru
      _
    // Predicated region
    $region90: #{vae_forward_pallas.1} parent=1 // pred_check
      _
    $region91: #{vae_forward_pallas.1} parent=1 // pred_check_branch
      %1999 = sbr.rel (0) target = $region93
    $region92: #{vae_forward_pallas.1} parent=1 // pred_region
      _
    $region93: #{vae_forward_pallas.1} parent=1 // pred_fallthru
      _
    %2000 = vsyncpa [#allocation3], 1
    %2001 = vsyncpa [#allocation6], 1
    %2002 = vsyncpa [#allocation9], 1
    %2003 = vsyncpa [#allocation12], 1
    %2004 = vsyncpa [#allocation4], 1

</llo_original>
